<compile_context>
chip_gen: v5e
topology: v5e:2x2
jax: 0.10.0
libtpu: 0.0.40
codegen_flags: <defaults>
</compile_context>

<pallas_src>
import jax
import jax.numpy as jnp
from jax import lax
from jax.experimental import pallas as pl
from jax.experimental.pallas import tpu as pltpu


def _round_up(x, m):
    return ((x + m - 1) // m) * m


# -----------------------------------------------------------------------------
# Fused kernel: num_layers liquid reservoirs (sequential recurrence) + head.
# Ref order: x, (w_in, w_rec, b) per layer, w_out, b_out, w_u1, b_u1, w_u2_row,
#            b_u2  |  states per layer, logits, hidden, scalars  |  u_scr
# -----------------------------------------------------------------------------
def _make_fused_kernel(num_layers, seq_len, tb, leak, out_dim):
    leak = float(leak)
    unroll = True if seq_len <= 16 else 8

    def kernel(*refs):
        idx = 0
        x_ref = refs[idx]; idx += 1
        layer_refs = []
        for _ in range(num_layers):
            layer_refs.append((refs[idx], refs[idx + 1], refs[idx + 2]))
            idx += 3
        (w_out_ref, b_out_ref, w_u1_ref, b_u1_ref,
         w_u2_ref, b_u2_ref) = refs[idx:idx + 6]
        idx += 6
        states_refs = refs[idx:idx + num_layers]; idx += num_layers
        logits_ref, hidden_ref, scal_ref = refs[idx:idx + 3]; idx += 3
        u_scr = refs[idx]

        f32 = jnp.float32
        bf16 = jnp.bfloat16
        hp = u_scr.shape[-1]

        cur_ref = x_ref                                   # (S, TB, D_prev_pad)
        h_last = None
        for li in range(num_layers):
            w_in_ref, w_rec_ref, b_ref = layer_refs[li]
            st_ref = states_refs[li]

            # Hoisted input projection for ALL timesteps (one big MXU matmul),
            # bias added once (not re-broadcast every iteration).
            xin = cur_ref[...].astype(bf16).reshape(seq_len * tb,
                                                    cur_ref.shape[-1])
            u = jnp.dot(xin, w_in_ref[...], preferred_element_type=f32)
            u = u + b_ref[...]
            u_scr[...] = u.reshape(seq_len, tb, hp)

            w_rec = w_rec_ref[...]                        # (Hp, Hp) bf16, in vregs

            def body(t, h):
                pre = jnp.dot(h.astype(bf16), w_rec,
                              preferred_element_type=f32) + u_scr[t]
                h_new = (1.0 - leak) * h + leak * jnp.tanh(pre)
                st_ref[t] = h_new                         # full (TB,128) store
                return h_new

            h0 = jnp.zeros((tb, hp), f32)
            h_last = lax.fori_loop(0, seq_len, body, h0, unroll=unroll)
            cur_ref = st_ref                              # next layer's input

        # ----------------------------- fused head -----------------------------
        h = h_last                                        # (TB, Hp) f32
        hidden_ref[...] = h

        logits = jnp.dot(h.astype(bf16), w_out_ref[...],
                         preferred_element_type=f32) + b_out_ref[...]
        logits_ref[...] = logits

        # uncertainty MLP; final (HU,1) matmul done as VPU multiply + reduce
        u1 = jnp.dot(h.astype(bf16), w_u1_ref[...],
                     preferred_element_type=f32) + b_u1_ref[...]
        u1 = jnp.maximum(u1, 0.0)
        u2 = jnp.sum(u1 * w_u2_ref[...], axis=-1, keepdims=True) + b_u2_ref[...]
        unc = jax.nn.sigmoid(u2)                          # (TB, 1)

        if out_dim > 1:
            # confidence = max softmax prob over the REAL output columns only
            col = lax.broadcasted_iota(jnp.int32, logits.shape, 1)
            masked = jnp.where(col < out_dim, logits, jnp.float32(-1e30))
            m = jnp.max(masked, axis=-1, keepdims=True)
            e = jnp.exp(masked - m)                       # max(e) == 1
            conf = pl.reciprocal(jnp.sum(e, axis=-1, keepdims=True), approx=True)
        else:
            conf = 1.0 - unc                              # output_dim == 1 branch

        # pack confidence (col 0) and uncertainty (col 1) into one lane-dense slab
        scol = lax.broadcasted_iota(jnp.int32, (tb, scal_ref.shape[-1]), 1)
        scal_ref[...] = jnp.where(scol == 0, conf,
                                  jnp.where(scol == 1, unc, 0.0))

    return kernel


# -----------------------------------------------------------------------------
# Wrapper: pad to lane-dense shapes, run the fused kernel, slice back.
# -----------------------------------------------------------------------------
def ua_lnn_forward(x, params, config):
    if x.ndim == 2:
        x = x[:, None, :]
    B, S, D = x.shape
    H = config["hidden_dim"]
    O = config["output_dim"]
    L = config["num_layers"]
    leak = config["leak_rate"]
    HU = H // 2

    TB = 8
    Bp = _round_up(B, TB)
    Dp = _round_up(D, 128)
    Hp = _round_up(H, 128)
    Op = _round_up(O, 128)
    HUp = _round_up(HU, 128)

    # time-major, zero-padded input (padded lanes/rows stay inert in the net)
    x_tm = jnp.transpose(x.astype(jnp.float32), (1, 0, 2))
    x_tm = jnp.pad(x_tm, ((0, 0), (0, Bp - B), (0, Dp - D)))

    def pad2(a, r, c, dtype):
        a = jnp.asarray(a, jnp.float32)
        return jnp.pad(a, ((0, r - a.shape[0]), (0, c - a.shape[1]))).astype(dtype)

    flat = []
    in_specs = [pl.BlockSpec((S, TB, Dp), lambda b: (0, b, 0))]
    for li in range(L):
        w_in, w_rec, bias = params["reservoirs"][li]
        dprev_p = Dp if li == 0 else Hp
        flat += [pad2(w_in, dprev_p, Hp, jnp.bfloat16),
                 pad2(w_rec, Hp, Hp, jnp.bfloat16),
                 pad2(bias, 1, Hp, jnp.float32)]
        in_specs += [pl.BlockSpec((dprev_p, Hp), lambda b: (0, 0)),
                     pl.BlockSpec((Hp, Hp), lambda b: (0, 0)),
                     pl.BlockSpec((1, Hp), lambda b: (0, 0))]

    flat += [pad2(params["w_out"], Hp, Op, jnp.bfloat16),
             pad2(params["b_out"], 1, Op, jnp.float32),
             pad2(params["w_u1"], Hp, HUp, jnp.bfloat16),
             pad2(params["b_u1"], 1, HUp, jnp.float32),
             pad2(params["w_u2_row"], 1, HUp, jnp.float32),
             jnp.asarray(params["b_u2"], jnp.float32).reshape(1, 1)]
    in_specs += [pl.BlockSpec((Hp, Op), lambda b: (0, 0)),
                 pl.BlockSpec((1, Op), lambda b: (0, 0)),
                 pl.BlockSpec((Hp, HUp), lambda b: (0, 0)),
                 pl.BlockSpec((1, HUp), lambda b: (0, 0)),
                 pl.BlockSpec((1, HUp), lambda b: (0, 0)),
                 pl.BlockSpec((1, 1), lambda b: (0, 0))]

    out_shape = tuple([jax.ShapeDtypeStruct((S, Bp, Hp), jnp.float32)] * L
                      + [jax.ShapeDtypeStruct((Bp, Op), jnp.float32),
                         jax.ShapeDtypeStruct((Bp, Hp), jnp.float32),
                         jax.ShapeDtypeStruct((Bp, 128), jnp.float32)])
    out_specs = tuple([pl.BlockSpec((S, TB, Hp), lambda b: (0, b, 0))] * L
                      + [pl.BlockSpec((TB, Op), lambda b: (b, 0)),
                         pl.BlockSpec((TB, Hp), lambda b: (b, 0)),
                         pl.BlockSpec((TB, 128), lambda b: (b, 0))])

    kernel = _make_fused_kernel(L, S, TB, leak, O)
    outs = pl.pallas_call(
        kernel,
        grid=(Bp // TB,),
        in_specs=in_specs,
        out_specs=out_specs,
        out_shape=out_shape,
        scratch_shapes=[pltpu.VMEM((S, TB, Hp), jnp.float32)],
        compiler_params=pltpu.CompilerParams(
            dimension_semantics=("parallel",),
            vmem_limit_bytes=32 * 1024 * 1024),
    )(x_tm, *flat)

    # kernel writes states time-major for contiguous full-tile stores; the
    # batch-major view the module returns is produced on the sliced arrays
    states = [jnp.transpose(s[:, :B, :H], (1, 0, 2)) for s in outs[:L]]
    logits = outs[L][:B, :O]
    hidden = outs[L + 1][:B, :H]
    scal = outs[L + 2]
    confidence = scal[:B, 0]
    uncertainty = scal[:B, 1:2]

    return {
        "output": logits,
        "confidence": confidence,
        "uncertainty": uncertainty,
        # TODO(synk): UncertaintyModule internals (uncertainty_info) not in the provided source.
        "uncertainty_info": {},
        "hidden_features": hidden,
        "reservoir_states": states,
        # TODO(synk): per-reservoir adaptive_norm diagnostics depend on undefined LiquidReservoir internals.
        "diagnostics": {"reservoir_info": [{} for _ in range(L)],
                        "adaptation_active": False},
    }


# -----------------------------------------------------------------------------
# Pure-JAX f32 reference (same math, unpadded) for a loose numeric check.
# -----------------------------------------------------------------------------
def ua_lnn_reference(x, params, config):
    if x.ndim == 2:
        x = x[:, None, :]
    leak = config["leak_rate"]
    B, S, _ = x.shape
    cur = x.astype(jnp.float32)
    for (w_in, w_rec, b) in params["reservoirs"]:
        H = w_in.shape[1]
        h = jnp.zeros((B, H), jnp.float32)
        steps = []
        for t in range(S):
            pre = cur[:, t, :] @ w_in + h @ w_rec + b
            h = (1.0 - leak) * h + leak * jnp.tanh(pre)
            steps.append(h)
        cur = jnp.stack(steps, axis=1)
    hidden = cur[:, -1, :]
    logits = hidden @ params["w_out"] + params["b_out"]
    conf = jnp.max(jax.nn.softmax(logits, axis=-1), axis=-1)
    u1 = jnp.maximum(hidden @ params["w_u1"] + params["b_u1"], 0.0)
    u2 = jnp.sum(u1 * params["w_u2_row"], axis=-1, keepdims=True) + params["b_u2"]
    unc = jax.nn.sigmoid(u2)
    return logits, conf, unc, hidden


def init_params(key, input_dim, hidden_dim, output_dim, num_layers):
    dims = [input_dim] + [hidden_dim] * num_layers
    keys = jax.random.split(key, 3 * num_layers + 4)
    ki = 0
    reservoirs = []
    for i in range(num_layers):
        din, h = dims[i], dims[i + 1]
        w_in = 0.3 * jax.random.normal(keys[ki], (din, h), jnp.float32); ki += 1
        w_rec = 0.1 * jax.random.normal(keys[ki], (h, h), jnp.float32); ki += 1
        b = 0.01 * jax.random.normal(keys[ki], (1, h), jnp.float32); ki += 1
        reservoirs.append((w_in, w_rec, b))
    h, hu = hidden_dim, hidden_dim // 2
    params = {"reservoirs": reservoirs}
    params["w_out"] = 0.2 * jax.random.normal(keys[ki], (h, output_dim), jnp.float32); ki += 1
    params["b_out"] = jnp.zeros((1, output_dim), jnp.float32)
    params["w_u1"] = 0.2 * jax.random.normal(keys[ki], (h, hu), jnp.float32); ki += 1
    params["b_u1"] = jnp.zeros((1, hu), jnp.float32)
    params["w_u2_row"] = 0.2 * jax.random.normal(keys[ki], (1, hu), jnp.float32); ki += 1
    params["b_u2"] = jnp.zeros((1, 1), jnp.float32)
    return params


if __name__ == "__main__":
    config = {
        "input_dim": 16,
        "hidden_dim": 32,
        "output_dim": 8,
        "num_layers": 2,
        "leak_rate": 0.5,
        "dropout_rate": 0.1,   # eval mode -> identity
        "medical_mode": False,
    }
    batch, seq = 2, 8

    key = jax.random.PRNGKey(0)
    kx, kp = jax.random.split(key)
    x = jax.random.normal(kx, (batch, seq, config["input_dim"]), jnp.float32)
    params = init_params(kp, config["input_dim"], config["hidden_dim"],
                         config["output_dim"], config["num_layers"])

    results = ua_lnn_forward(x, params, config)
    jax.block_until_ready(results["output"])
    jax.block_until_ready(results["confidence"])
    jax.block_until_ready(results["uncertainty"])

    # shape checks (module contract)
    assert results["output"].shape == (batch, config["output_dim"])
    assert results["confidence"].shape == (batch,)
    assert results["uncertainty"].shape == (batch, 1)
    assert results["hidden_features"].shape == (batch, config["hidden_dim"])
    assert len(results["reservoir_states"]) == config["num_layers"]
    assert results["reservoir_states"][0].shape == (batch, seq, config["hidden_dim"])

    # loose numeric check vs pure-JAX f32 reference (kernel uses bf16 MXU inputs)
    ref_logits, ref_conf, ref_unc, ref_hidden = ua_lnn_reference(x, params, config)
    assert bool(jnp.all(jnp.isfinite(results["output"])))
    assert float(jnp.max(jnp.abs(results["output"] - ref_logits))) < 0.1
    assert float(jnp.max(jnp.abs(results["confidence"] - ref_conf))) < 0.05
    assert float(jnp.max(jnp.abs(results["uncertainty"] - ref_unc))) < 0.05
    assert float(jnp.max(jnp.abs(results["hidden_features"] - ref_hidden))) < 0.1

    print("KERNEL_OK")
</pallas_src>

<mosaic_0001>
module attributes {stable_mosaic.version = 11 : i64} {
  func.func @kernel(%arg0: i32, %arg1: memref<8x8x128xf32, #tpu.memory_space<vmem>>, %arg2: memref<128x128xbf16, #tpu.memory_space<vmem>>, %arg3: memref<128x128xbf16, #tpu.memory_space<vmem>>, %arg4: memref<1x128xf32, #tpu.memory_space<vmem>>, %arg5: memref<128x128xbf16, #tpu.memory_space<vmem>>, %arg6: memref<128x128xbf16, #tpu.memory_space<vmem>>, %arg7: memref<1x128xf32, #tpu.memory_space<vmem>>, %arg8: memref<128x128xbf16, #tpu.memory_space<vmem>>, %arg9: memref<1x128xf32, #tpu.memory_space<vmem>>, %arg10: memref<128x128xbf16, #tpu.memory_space<vmem>>, %arg11: memref<1x128xf32, #tpu.memory_space<vmem>>, %arg12: memref<1x128xf32, #tpu.memory_space<vmem>>, %arg13: memref<1x1xf32, #tpu.memory_space<vmem>>, %arg14: memref<8x8x128xf32, #tpu.memory_space<vmem>>, %arg15: memref<8x8x128xf32, #tpu.memory_space<vmem>>, %arg16: memref<8x128xf32, #tpu.memory_space<vmem>>, %arg17: memref<8x128xf32, #tpu.memory_space<vmem>>, %arg18: memref<8x128xf32, #tpu.memory_space<vmem>>, %arg19: memref<8x8x128xf32, #tpu.memory_space<vmem>>) attributes {dimension_semantics = [#tpu.dimension_semantics<parallel>], iteration_bounds = array<i64: 1>, scalar_prefetch = 0 : i64, scratch_operands = 1 : i64, tpu.core_type = #tpu.core_type<tc>, window_params = [{transform_indices = @transform_0, window_bounds = array<i64: 8, 8, 128>}, {pipeline_mode = #tpu.pipeline_mode<synchronous>, transform_indices = @transform_1, window_bounds = array<i64: 128, 128>}, {pipeline_mode = #tpu.pipeline_mode<synchronous>, transform_indices = @transform_2, window_bounds = array<i64: 128, 128>}, {pipeline_mode = #tpu.pipeline_mode<synchronous>, transform_indices = @transform_3, window_bounds = array<i64: 1, 128>}, {pipeline_mode = #tpu.pipeline_mode<synchronous>, transform_indices = @transform_4, window_bounds = array<i64: 128, 128>}, {pipeline_mode = #tpu.pipeline_mode<synchronous>, transform_indices = @transform_5, window_bounds = array<i64: 128, 128>}, {pipeline_mode = #tpu.pipeline_mode<synchronous>, transform_indices = @transform_6, window_bounds = array<i64: 1, 128>}, {pipeline_mode = #tpu.pipeline_mode<synchronous>, transform_indices = @transform_7, window_bounds = array<i64: 128, 128>}, {pipeline_mode = #tpu.pipeline_mode<synchronous>, transform_indices = @transform_8, window_bounds = array<i64: 1, 128>}, {pipeline_mode = #tpu.pipeline_mode<synchronous>, transform_indices = @transform_9, window_bounds = array<i64: 128, 128>}, {pipeline_mode = #tpu.pipeline_mode<synchronous>, transform_indices = @transform_10, window_bounds = array<i64: 1, 128>}, {pipeline_mode = #tpu.pipeline_mode<synchronous>, transform_indices = @transform_11, window_bounds = array<i64: 1, 128>}, {pipeline_mode = #tpu.pipeline_mode<synchronous>, transform_indices = @transform_12, window_bounds = array<i64: 1, 1>}, {transform_indices = @transform_13, window_bounds = array<i64: 8, 8, 128>}, {transform_indices = @transform_14, window_bounds = array<i64: 8, 8, 128>}, {transform_indices = @transform_15, window_bounds = array<i64: 8, 128>}, {transform_indices = @transform_16, window_bounds = array<i64: 8, 128>}, {transform_indices = @transform_17, window_bounds = array<i64: 8, 128>}]} {
    %c0 = arith.constant 0 : index
    %c0_0 = arith.constant 0 : index
    %c0_1 = arith.constant 0 : index
    %0 = vector.load %arg1[%c0, %c0_0, %c0_1] : memref<8x8x128xf32, #tpu.memory_space<vmem>>, vector<8x8x128xf32>
    %1 = arith.truncf %0 : vector<8x8x128xf32> to vector<8x8x128xbf16>
    %2 = vector.shape_cast %1 : vector<8x8x128xbf16> to vector<64x128xbf16>
    %c0_2 = arith.constant 0 : index
    %c0_3 = arith.constant 0 : index
    %3 = vector.load %arg2[%c0_2, %c0_3] : memref<128x128xbf16, #tpu.memory_space<vmem>>, vector<128x128xbf16>
    %cst = arith.constant dense<0.000000e+00> : vector<64x128xf32>
    %4 = tpu.matmul %2, %3, %cst {dimension_numbers = #tpu.dot_dimension_numbers<[1], [0], [0], [1], [0, 0, 1, 1], [], []>} : vector<64x128xbf16>, vector<128x128xbf16>, vector<64x128xf32> -> vector<64x128xf32>
    %c0_4 = arith.constant 0 : index
    %c0_5 = arith.constant 0 : index
    %5 = vector.load %arg4[%c0_4, %c0_5] : memref<1x128xf32, #tpu.memory_space<vmem>>, vector<1x128xf32>
    %6 = vector.broadcast %5 : vector<1x128xf32> to vector<64x128xf32>
    %7 = arith.addf %4, %6 : vector<64x128xf32>
    %8 = vector.shape_cast %7 : vector<64x128xf32> to vector<8x8x128xf32>
    %c0_6 = arith.constant 0 : index
    %c0_7 = arith.constant 0 : index
    %c0_8 = arith.constant 0 : index
    %9 = vector.load %arg19[%c0_6, %c0_7, %c0_8] : memref<8x8x128xf32, #tpu.memory_space<vmem>>, vector<8x8x128xf32>
    tpu.vector_store %arg19[%c0_6, %c0_7, %c0_8], %8 {strides = array<i32>} : memref<8x8x128xf32, #tpu.memory_space<vmem>>, vector<8x8x128xf32>,
    %c0_9 = arith.constant 0 : index
    %c0_10 = arith.constant 0 : index
    %10 = vector.load %arg3[%c0_9, %c0_10] : memref<128x128xbf16, #tpu.memory_space<vmem>>, vector<128x128xbf16>
    %cst_11 = arith.constant 0.000000e+00 : f32
    %11 = vector.broadcast %cst_11 : f32 to vector<8x128xf32>
    %c0_i32 = arith.constant 0 : i32
    %12 = arith.truncf %11 : vector<8x128xf32> to vector<8x128xbf16>
    %cst_12 = arith.constant dense<0.000000e+00> : vector<8x128xf32>
    %13 = tpu.matmul %12, %10, %cst_12 {dimension_numbers = #tpu.dot_dimension_numbers<[1], [0], [0], [1], [0, 0, 1, 1], [], []>} : vector<8x128xbf16>, vector<128x128xbf16>, vector<8x128xf32> -> vector<8x128xf32>
    %14 = arith.index_cast %c0_i32 : i32 to index
    %c0_13 = arith.constant 0 : index
    %c0_14 = arith.constant 0 : index
    %15 = vector.load %arg19[%14, %c0_13, %c0_14] : memref<8x8x128xf32, #tpu.memory_space<vmem>>, vector<1x8x128xf32>
    %16 = vector.shape_cast %15 : vector<1x8x128xf32> to vector<8x128xf32>
    %17 = arith.addf %13, %16 : vector<8x128xf32>
    %cst_15 = arith.constant 5.000000e-01 : f32
    %18 = vector.broadcast %cst_15 : f32 to vector<8x128xf32>
    %19 = arith.mulf %18, %11 : vector<8x128xf32>
    %20 = math.tanh %17 : vector<8x128xf32>
    %cst_16 = arith.constant 5.000000e-01 : f32
    %21 = vector.broadcast %cst_16 : f32 to vector<8x128xf32>
    %22 = arith.mulf %21, %20 : vector<8x128xf32>
    %23 = arith.addf %19, %22 : vector<8x128xf32>
    %24 = arith.index_cast %c0_i32 : i32 to index
    %c0_17 = arith.constant 0 : index
    %c0_18 = arith.constant 0 : index
    %25 = vector.load %arg14[%24, %c0_17, %c0_18] : memref<8x8x128xf32, #tpu.memory_space<vmem>>, vector<1x8x128xf32>
    %26 = vector.shape_cast %25 : vector<1x8x128xf32> to vector<8x128xf32>
    %27 = vector.shape_cast %23 : vector<8x128xf32> to vector<1x8x128xf32>
    tpu.vector_store %arg14[%24, %c0_17, %c0_18], %27 {strides = array<i32>} : memref<8x8x128xf32, #tpu.memory_space<vmem>>, vector<1x8x128xf32>,
    %c1_i32 = arith.constant 1 : i32
    %28 = arith.truncf %23 : vector<8x128xf32> to vector<8x128xbf16>
    %cst_19 = arith.constant dense<0.000000e+00> : vector<8x128xf32>
    %29 = tpu.matmul %28, %10, %cst_19 {dimension_numbers = #tpu.dot_dimension_numbers<[1], [0], [0], [1], [0, 0, 1, 1], [], []>} : vector<8x128xbf16>, vector<128x128xbf16>, vector<8x128xf32> -> vector<8x128xf32>
    %30 = arith.index_cast %c1_i32 : i32 to index
    %c0_20 = arith.constant 0 : index
    %c0_21 = arith.constant 0 : index
    %31 = vector.load %arg19[%30, %c0_20, %c0_21] : memref<8x8x128xf32, #tpu.memory_space<vmem>>, vector<1x8x128xf32>
    %32 = vector.shape_cast %31 : vector<1x8x128xf32> to vector<8x128xf32>
    %33 = arith.addf %29, %32 : vector<8x128xf32>
    %cst_22 = arith.constant 5.000000e-01 : f32
    %34 = vector.broadcast %cst_22 : f32 to vector<8x128xf32>
    %35 = arith.mulf %34, %23 : vector<8x128xf32>
    %36 = math.tanh %33 : vector<8x128xf32>
    %cst_23 = arith.constant 5.000000e-01 : f32
    %37 = vector.broadcast %cst_23 : f32 to vector<8x128xf32>
    %38 = arith.mulf %37, %36 : vector<8x128xf32>
    %39 = arith.addf %35, %38 : vector<8x128xf32>
    %40 = arith.index_cast %c1_i32 : i32 to index
    %c0_24 = arith.constant 0 : index
    %c0_25 = arith.constant 0 : index
    %41 = vector.load %arg14[%40, %c0_24, %c0_25] : memref<8x8x128xf32, #tpu.memory_space<vmem>>, vector<1x8x128xf32>
    %42 = vector.shape_cast %41 : vector<1x8x128xf32> to vector<8x128xf32>
    %43 = vector.shape_cast %39 : vector<8x128xf32> to vector<1x8x128xf32>
    tpu.vector_store %arg14[%40, %c0_24, %c0_25], %43 {strides = array<i32>} : memref<8x8x128xf32, #tpu.memory_space<vmem>>, vector<1x8x128xf32>,
    %c2_i32 = arith.constant 2 : i32
    %44 = arith.truncf %39 : vector<8x128xf32> to vector<8x128xbf16>
    %cst_26 = arith.constant dense<0.000000e+00> : vector<8x128xf32>
    %45 = tpu.matmul %44, %10, %cst_26 {dimension_numbers = #tpu.dot_dimension_numbers<[1], [0], [0], [1], [0, 0, 1, 1], [], []>} : vector<8x128xbf16>, vector<128x128xbf16>, vector<8x128xf32> -> vector<8x128xf32>
    %46 = arith.index_cast %c2_i32 : i32 to index
    %c0_27 = arith.constant 0 : index
    %c0_28 = arith.constant 0 : index
    %47 = vector.load %arg19[%46, %c0_27, %c0_28] : memref<8x8x128xf32, #tpu.memory_space<vmem>>, vector<1x8x128xf32>
    %48 = vector.shape_cast %47 : vector<1x8x128xf32> to vector<8x128xf32>
    %49 = arith.addf %45, %48 : vector<8x128xf32>
    %cst_29 = arith.constant 5.000000e-01 : f32
    %50 = vector.broadcast %cst_29 : f32 to vector<8x128xf32>
    %51 = arith.mulf %50, %39 : vector<8x128xf32>
    %52 = math.tanh %49 : vector<8x128xf32>
    %cst_30 = arith.constant 5.000000e-01 : f32
    %53 = vector.broadcast %cst_30 : f32 to vector<8x128xf32>
    %54 = arith.mulf %53, %52 : vector<8x128xf32>
    %55 = arith.addf %51, %54 : vector<8x128xf32>
    %56 = arith.index_cast %c2_i32 : i32 to index
    %c0_31 = arith.constant 0 : index
    %c0_32 = arith.constant 0 : index
    %57 = vector.load %arg14[%56, %c0_31, %c0_32] : memref<8x8x128xf32, #tpu.memory_space<vmem>>, vector<1x8x128xf32>
    %58 = vector.shape_cast %57 : vector<1x8x128xf32> to vector<8x128xf32>
    %59 = vector.shape_cast %55 : vector<8x128xf32> to vector<1x8x128xf32>
    tpu.vector_store %arg14[%56, %c0_31, %c0_32], %59 {strides = array<i32>} : memref<8x8x128xf32, #tpu.memory_space<vmem>>, vector<1x8x128xf32>,
    %c3_i32 = arith.constant 3 : i32
    %60 = arith.truncf %55 : vector<8x128xf32> to vector<8x128xbf16>
    %cst_33 = arith.constant dense<0.000000e+00> : vector<8x128xf32>
    %61 = tpu.matmul %60, %10, %cst_33 {dimension_numbers = #tpu.dot_dimension_numbers<[1], [0], [0], [1], [0, 0, 1, 1], [], []>} : vector<8x128xbf16>, vector<128x128xbf16>, vector<8x128xf32> -> vector<8x128xf32>
    %62 = arith.index_cast %c3_i32 : i32 to index
    %c0_34 = arith.constant 0 : index
    %c0_35 = arith.constant 0 : index
    %63 = vector.load %arg19[%62, %c0_34, %c0_35] : memref<8x8x128xf32, #tpu.memory_space<vmem>>, vector<1x8x128xf32>
    %64 = vector.shape_cast %63 : vector<1x8x128xf32> to vector<8x128xf32>
    %65 = arith.addf %61, %64 : vector<8x128xf32>
    %cst_36 = arith.constant 5.000000e-01 : f32
    %66 = vector.broadcast %cst_36 : f32 to vector<8x128xf32>
    %67 = arith.mulf %66, %55 : vector<8x128xf32>
    %68 = math.tanh %65 : vector<8x128xf32>
    %cst_37 = arith.constant 5.000000e-01 : f32
    %69 = vector.broadcast %cst_37 : f32 to vector<8x128xf32>
    %70 = arith.mulf %69, %68 : vector<8x128xf32>
    %71 = arith.addf %67, %70 : vector<8x128xf32>
    %72 = arith.index_cast %c3_i32 : i32 to index
    %c0_38 = arith.constant 0 : index
    %c0_39 = arith.constant 0 : index
    %73 = vector.load %arg14[%72, %c0_38, %c0_39] : memref<8x8x128xf32, #tpu.memory_space<vmem>>, vector<1x8x128xf32>
    %74 = vector.shape_cast %73 : vector<1x8x128xf32> to vector<8x128xf32>
    %75 = vector.shape_cast %71 : vector<8x128xf32> to vector<1x8x128xf32>
    tpu.vector_store %arg14[%72, %c0_38, %c0_39], %75 {strides = array<i32>} : memref<8x8x128xf32, #tpu.memory_space<vmem>>, vector<1x8x128xf32>,
    %c4_i32 = arith.constant 4 : i32
    %76 = arith.truncf %71 : vector<8x128xf32> to vector<8x128xbf16>
    %cst_40 = arith.constant dense<0.000000e+00> : vector<8x128xf32>
    %77 = tpu.matmul %76, %10, %cst_40 {dimension_numbers = #tpu.dot_dimension_numbers<[1], [0], [0], [1], [0, 0, 1, 1], [], []>} : vector<8x128xbf16>, vector<128x128xbf16>, vector<8x128xf32> -> vector<8x128xf32>
    %78 = arith.index_cast %c4_i32 : i32 to index
    %c0_41 = arith.constant 0 : index
    %c0_42 = arith.constant 0 : index
    %79 = vector.load %arg19[%78, %c0_41, %c0_42] : memref<8x8x128xf32, #tpu.memory_space<vmem>>, vector<1x8x128xf32>
    %80 = vector.shape_cast %79 : vector<1x8x128xf32> to vector<8x128xf32>
    %81 = arith.addf %77, %80 : vector<8x128xf32>
    %cst_43 = arith.constant 5.000000e-01 : f32
    %82 = vector.broadcast %cst_43 : f32 to vector<8x128xf32>
    %83 = arith.mulf %82, %71 : vector<8x128xf32>
    %84 = math.tanh %81 : vector<8x128xf32>
    %cst_44 = arith.constant 5.000000e-01 : f32
    %85 = vector.broadcast %cst_44 : f32 to vector<8x128xf32>
    %86 = arith.mulf %85, %84 : vector<8x128xf32>
    %87 = arith.addf %83, %86 : vector<8x128xf32>
    %88 = arith.index_cast %c4_i32 : i32 to index
    %c0_45 = arith.constant 0 : index
    %c0_46 = arith.constant 0 : index
    %89 = vector.load %arg14[%88, %c0_45, %c0_46] : memref<8x8x128xf32, #tpu.memory_space<vmem>>, vector<1x8x128xf32>
    %90 = vector.shape_cast %89 : vector<1x8x128xf32> to vector<8x128xf32>
    %91 = vector.shape_cast %87 : vector<8x128xf32> to vector<1x8x128xf32>
    tpu.vector_store %arg14[%88, %c0_45, %c0_46], %91 {strides = array<i32>} : memref<8x8x128xf32, #tpu.memory_space<vmem>>, vector<1x8x128xf32>,
    %c5_i32 = arith.constant 5 : i32
    %92 = arith.truncf %87 : vector<8x128xf32> to vector<8x128xbf16>
    %cst_47 = arith.constant dense<0.000000e+00> : vector<8x128xf32>
    %93 = tpu.matmul %92, %10, %cst_47 {dimension_numbers = #tpu.dot_dimension_numbers<[1], [0], [0], [1], [0, 0, 1, 1], [], []>} : vector<8x128xbf16>, vector<128x128xbf16>, vector<8x128xf32> -> vector<8x128xf32>
    %94 = arith.index_cast %c5_i32 : i32 to index
    %c0_48 = arith.constant 0 : index
    %c0_49 = arith.constant 0 : index
    %95 = vector.load %arg19[%94, %c0_48, %c0_49] : memref<8x8x128xf32, #tpu.memory_space<vmem>>, vector<1x8x128xf32>
    %96 = vector.shape_cast %95 : vector<1x8x128xf32> to vector<8x128xf32>
    %97 = arith.addf %93, %96 : vector<8x128xf32>
    %cst_50 = arith.constant 5.000000e-01 : f32
    %98 = vector.broadcast %cst_50 : f32 to vector<8x128xf32>
    %99 = arith.mulf %98, %87 : vector<8x128xf32>
    %100 = math.tanh %97 : vector<8x128xf32>
    %cst_51 = arith.constant 5.000000e-01 : f32
    %101 = vector.broadcast %cst_51 : f32 to vector<8x128xf32>
    %102 = arith.mulf %101, %100 : vector<8x128xf32>
    %103 = arith.addf %99, %102 : vector<8x128xf32>
    %104 = arith.index_cast %c5_i32 : i32 to index
    %c0_52 = arith.constant 0 : index
    %c0_53 = arith.constant 0 : index
    %105 = vector.load %arg14[%104, %c0_52, %c0_53] : memref<8x8x128xf32, #tpu.memory_space<vmem>>, vector<1x8x128xf32>
    %106 = vector.shape_cast %105 : vector<1x8x128xf32> to vector<8x128xf32>
    %107 = vector.shape_cast %103 : vector<8x128xf32> to vector<1x8x128xf32>
    tpu.vector_store %arg14[%104, %c0_52, %c0_53], %107 {strides = array<i32>} : memref<8x8x128xf32, #tpu.memory_space<vmem>>, vector<1x8x128xf32>,
    %c6_i32 = arith.constant 6 : i32
    %108 = arith.truncf %103 : vector<8x128xf32> to vector<8x128xbf16>
    %cst_54 = arith.constant dense<0.000000e+00> : vector<8x128xf32>
    %109 = tpu.matmul %108, %10, %cst_54 {dimension_numbers = #tpu.dot_dimension_numbers<[1], [0], [0], [1], [0, 0, 1, 1], [], []>} : vector<8x128xbf16>, vector<128x128xbf16>, vector<8x128xf32> -> vector<8x128xf32>
    %110 = arith.index_cast %c6_i32 : i32 to index
    %c0_55 = arith.constant 0 : index
    %c0_56 = arith.constant 0 : index
    %111 = vector.load %arg19[%110, %c0_55, %c0_56] : memref<8x8x128xf32, #tpu.memory_space<vmem>>, vector<1x8x128xf32>
    %112 = vector.shape_cast %111 : vector<1x8x128xf32> to vector<8x128xf32>
    %113 = arith.addf %109, %112 : vector<8x128xf32>
    %cst_57 = arith.constant 5.000000e-01 : f32
    %114 = vector.broadcast %cst_57 : f32 to vector<8x128xf32>
    %115 = arith.mulf %114, %103 : vector<8x128xf32>
    %116 = math.tanh %113 : vector<8x128xf32>
    %cst_58 = arith.constant 5.000000e-01 : f32
    %117 = vector.broadcast %cst_58 : f32 to vector<8x128xf32>
    %118 = arith.mulf %117, %116 : vector<8x128xf32>
    %119 = arith.addf %115, %118 : vector<8x128xf32>
    %120 = arith.index_cast %c6_i32 : i32 to index
    %c0_59 = arith.constant 0 : index
    %c0_60 = arith.constant 0 : index
    %121 = vector.load %arg14[%120, %c0_59, %c0_60] : memref<8x8x128xf32, #tpu.memory_space<vmem>>, vector<1x8x128xf32>
    %122 = vector.shape_cast %121 : vector<1x8x128xf32> to vector<8x128xf32>
    %123 = vector.shape_cast %119 : vector<8x128xf32> to vector<1x8x128xf32>
    tpu.vector_store %arg14[%120, %c0_59, %c0_60], %123 {strides = array<i32>} : memref<8x8x128xf32, #tpu.memory_space<vmem>>, vector<1x8x128xf32>,
    %c7_i32 = arith.constant 7 : i32
    %124 = arith.truncf %119 : vector<8x128xf32> to vector<8x128xbf16>
    %cst_61 = arith.constant dense<0.000000e+00> : vector<8x128xf32>
    %125 = tpu.matmul %124, %10, %cst_61 {dimension_numbers = #tpu.dot_dimension_numbers<[1], [0], [0], [1], [0, 0, 1, 1], [], []>} : vector<8x128xbf16>, vector<128x128xbf16>, vector<8x128xf32> -> vector<8x128xf32>
    %126 = arith.index_cast %c7_i32 : i32 to index
    %c0_62 = arith.constant 0 : index
    %c0_63 = arith.constant 0 : index
    %127 = vector.load %arg19[%126, %c0_62, %c0_63] : memref<8x8x128xf32, #tpu.memory_space<vmem>>, vector<1x8x128xf32>
    %128 = vector.shape_cast %127 : vector<1x8x128xf32> to vector<8x128xf32>
    %129 = arith.addf %125, %128 : vector<8x128xf32>
    %cst_64 = arith.constant 5.000000e-01 : f32
    %130 = vector.broadcast %cst_64 : f32 to vector<8x128xf32>
    %131 = arith.mulf %130, %119 : vector<8x128xf32>
    %132 = math.tanh %129 : vector<8x128xf32>
    %cst_65 = arith.constant 5.000000e-01 : f32
    %133 = vector.broadcast %cst_65 : f32 to vector<8x128xf32>
    %134 = arith.mulf %133, %132 : vector<8x128xf32>
    %135 = arith.addf %131, %134 : vector<8x128xf32>
    %136 = arith.index_cast %c7_i32 : i32 to index
    %c0_66 = arith.constant 0 : index
    %c0_67 = arith.constant 0 : index
    %137 = vector.load %arg14[%136, %c0_66, %c0_67] : memref<8x8x128xf32, #tpu.memory_space<vmem>>, vector<1x8x128xf32>
    %138 = vector.shape_cast %137 : vector<1x8x128xf32> to vector<8x128xf32>
    %139 = vector.shape_cast %135 : vector<8x128xf32> to vector<1x8x128xf32>
    tpu.vector_store %arg14[%136, %c0_66, %c0_67], %139 {strides = array<i32>} : memref<8x8x128xf32, #tpu.memory_space<vmem>>, vector<1x8x128xf32>,
    %c8_i32 = arith.constant 8 : i32
    %c0_68 = arith.constant 0 : index
    %c0_69 = arith.constant 0 : index
    %c0_70 = arith.constant 0 : index
    %140 = vector.load %arg14[%c0_68, %c0_69, %c0_70] : memref<8x8x128xf32, #tpu.memory_space<vmem>>, vector<8x8x128xf32>
    %141 = arith.truncf %140 : vector<8x8x128xf32> to vector<8x8x128xbf16>
    %142 = vector.shape_cast %141 : vector<8x8x128xbf16> to vector<64x128xbf16>
    %c0_71 = arith.constant 0 : index
    %c0_72 = arith.constant 0 : index
    %143 = vector.load %arg5[%c0_71, %c0_72] : memref<128x128xbf16, #tpu.memory_space<vmem>>, vector<128x128xbf16>
    %cst_73 = arith.constant dense<0.000000e+00> : vector<64x128xf32>
    %144 = tpu.matmul %142, %143, %cst_73 {dimension_numbers = #tpu.dot_dimension_numbers<[1], [0], [0], [1], [0, 0, 1, 1], [], []>} : vector<64x128xbf16>, vector<128x128xbf16>, vector<64x128xf32> -> vector<64x128xf32>
    %c0_74 = arith.constant 0 : index
    %c0_75 = arith.constant 0 : index
    %145 = vector.load %arg7[%c0_74, %c0_75] : memref<1x128xf32, #tpu.memory_space<vmem>>, vector<1x128xf32>
    %146 = vector.broadcast %145 : vector<1x128xf32> to vector<64x128xf32>
    %147 = arith.addf %144, %146 : vector<64x128xf32>
    %148 = vector.shape_cast %147 : vector<64x128xf32> to vector<8x8x128xf32>
    %c0_76 = arith.constant 0 : index
    %c0_77 = arith.constant 0 : index
    %c0_78 = arith.constant 0 : index
    %149 = vector.load %arg19[%c0_76, %c0_77, %c0_78] : memref<8x8x128xf32, #tpu.memory_space<vmem>>, vector<8x8x128xf32>
    tpu.vector_store %arg19[%c0_76, %c0_77, %c0_78], %148 {strides = array<i32>} : memref<8x8x128xf32, #tpu.memory_space<vmem>>, vector<8x8x128xf32>,
    %c0_79 = arith.constant 0 : index
    %c0_80 = arith.constant 0 : index
    %150 = vector.load %arg6[%c0_79, %c0_80] : memref<128x128xbf16, #tpu.memory_space<vmem>>, vector<128x128xbf16>
    %cst_81 = arith.constant 0.000000e+00 : f32
    %151 = vector.broadcast %cst_81 : f32 to vector<8x128xf32>
    %c0_i32_82 = arith.constant 0 : i32
    %152 = arith.truncf %151 : vector<8x128xf32> to vector<8x128xbf16>
    %cst_83 = arith.constant dense<0.000000e+00> : vector<8x128xf32>
    %153 = tpu.matmul %152, %150, %cst_83 {dimension_numbers = #tpu.dot_dimension_numbers<[1], [0], [0], [1], [0, 0, 1, 1], [], []>} : vector<8x128xbf16>, vector<128x128xbf16>, vector<8x128xf32> -> vector<8x128xf32>
    %154 = arith.index_cast %c0_i32_82 : i32 to index
    %c0_84 = arith.constant 0 : index
    %c0_85 = arith.constant 0 : index
    %155 = vector.load %arg19[%154, %c0_84, %c0_85] : memref<8x8x128xf32, #tpu.memory_space<vmem>>, vector<1x8x128xf32>
    %156 = vector.shape_cast %155 : vector<1x8x128xf32> to vector<8x128xf32>
    %157 = arith.addf %153, %156 : vector<8x128xf32>
    %cst_86 = arith.constant 5.000000e-01 : f32
    %158 = vector.broadcast %cst_86 : f32 to vector<8x128xf32>
    %159 = arith.mulf %158, %151 : vector<8x128xf32>
    %160 = math.tanh %157 : vector<8x128xf32>
    %cst_87 = arith.constant 5.000000e-01 : f32
    %161 = vector.broadcast %cst_87 : f32 to vector<8x128xf32>
    %162 = arith.mulf %161, %160 : vector<8x128xf32>
    %163 = arith.addf %159, %162 : vector<8x128xf32>
    %164 = arith.index_cast %c0_i32_82 : i32 to index
    %c0_88 = arith.constant 0 : index
    %c0_89 = arith.constant 0 : index
    %165 = vector.load %arg15[%164, %c0_88, %c0_89] : memref<8x8x128xf32, #tpu.memory_space<vmem>>, vector<1x8x128xf32>
    %166 = vector.shape_cast %165 : vector<1x8x128xf32> to vector<8x128xf32>
    %167 = vector.shape_cast %163 : vector<8x128xf32> to vector<1x8x128xf32>
    tpu.vector_store %arg15[%164, %c0_88, %c0_89], %167 {strides = array<i32>} : memref<8x8x128xf32, #tpu.memory_space<vmem>>, vector<1x8x128xf32>,
    %c1_i32_90 = arith.constant 1 : i32
    %168 = arith.truncf %163 : vector<8x128xf32> to vector<8x128xbf16>
    %cst_91 = arith.constant dense<0.000000e+00> : vector<8x128xf32>
    %169 = tpu.matmul %168, %150, %cst_91 {dimension_numbers = #tpu.dot_dimension_numbers<[1], [0], [0], [1], [0, 0, 1, 1], [], []>} : vector<8x128xbf16>, vector<128x128xbf16>, vector<8x128xf32> -> vector<8x128xf32>
    %170 = arith.index_cast %c1_i32_90 : i32 to index
    %c0_92 = arith.constant 0 : index
    %c0_93 = arith.constant 0 : index
    %171 = vector.load %arg19[%170, %c0_92, %c0_93] : memref<8x8x128xf32, #tpu.memory_space<vmem>>, vector<1x8x128xf32>
    %172 = vector.shape_cast %171 : vector<1x8x128xf32> to vector<8x128xf32>
    %173 = arith.addf %169, %172 : vector<8x128xf32>
    %cst_94 = arith.constant 5.000000e-01 : f32
    %174 = vector.broadcast %cst_94 : f32 to vector<8x128xf32>
    %175 = arith.mulf %174, %163 : vector<8x128xf32>
    %176 = math.tanh %173 : vector<8x128xf32>
    %cst_95 = arith.constant 5.000000e-01 : f32
    %177 = vector.broadcast %cst_95 : f32 to vector<8x128xf32>
    %178 = arith.mulf %177, %176 : vector<8x128xf32>
    %179 = arith.addf %175, %178 : vector<8x128xf32>
    %180 = arith.index_cast %c1_i32_90 : i32 to index
    %c0_96 = arith.constant 0 : index
    %c0_97 = arith.constant 0 : index
    %181 = vector.load %arg15[%180, %c0_96, %c0_97] : memref<8x8x128xf32, #tpu.memory_space<vmem>>, vector<1x8x128xf32>
    %182 = vector.shape_cast %181 : vector<1x8x128xf32> to vector<8x128xf32>
    %183 = vector.shape_cast %179 : vector<8x128xf32> to vector<1x8x128xf32>
    tpu.vector_store %arg15[%180, %c0_96, %c0_97], %183 {strides = array<i32>} : memref<8x8x128xf32, #tpu.memory_space<vmem>>, vector<1x8x128xf32>,
    %c2_i32_98 = arith.constant 2 : i32
    %184 = arith.truncf %179 : vector<8x128xf32> to vector<8x128xbf16>
    %cst_99 = arith.constant dense<0.000000e+00> : vector<8x128xf32>
    %185 = tpu.matmul %184, %150, %cst_99 {dimension_numbers = #tpu.dot_dimension_numbers<[1], [0], [0], [1], [0, 0, 1, 1], [], []>} : vector<8x128xbf16>, vector<128x128xbf16>, vector<8x128xf32> -> vector<8x128xf32>
    %186 = arith.index_cast %c2_i32_98 : i32 to index
    %c0_100 = arith.constant 0 : index
    %c0_101 = arith.constant 0 : index
    %187 = vector.load %arg19[%186, %c0_100, %c0_101] : memref<8x8x128xf32, #tpu.memory_space<vmem>>, vector<1x8x128xf32>
    %188 = vector.shape_cast %187 : vector<1x8x128xf32> to vector<8x128xf32>
    %189 = arith.addf %185, %188 : vector<8x128xf32>
    %cst_102 = arith.constant 5.000000e-01 : f32
    %190 = vector.broadcast %cst_102 : f32 to vector<8x128xf32>
    %191 = arith.mulf %190, %179 : vector<8x128xf32>
    %192 = math.tanh %189 : vector<8x128xf32>
    %cst_103 = arith.constant 5.000000e-01 : f32
    %193 = vector.broadcast %cst_103 : f32 to vector<8x128xf32>
    %194 = arith.mulf %193, %192 : vector<8x128xf32>
    %195 = arith.addf %191, %194 : vector<8x128xf32>
    %196 = arith.index_cast %c2_i32_98 : i32 to index
    %c0_104 = arith.constant 0 : index
    %c0_105 = arith.constant 0 : index
    %197 = vector.load %arg15[%196, %c0_104, %c0_105] : memref<8x8x128xf32, #tpu.memory_space<vmem>>, vector<1x8x128xf32>
    %198 = vector.shape_cast %197 : vector<1x8x128xf32> to vector<8x128xf32>
    %199 = vector.shape_cast %195 : vector<8x128xf32> to vector<1x8x128xf32>
    tpu.vector_store %arg15[%196, %c0_104, %c0_105], %199 {strides = array<i32>} : memref<8x8x128xf32, #tpu.memory_space<vmem>>, vector<1x8x128xf32>,
    %c3_i32_106 = arith.constant 3 : i32
    %200 = arith.truncf %195 : vector<8x128xf32> to vector<8x128xbf16>
    %cst_107 = arith.constant dense<0.000000e+00> : vector<8x128xf32>
    %201 = tpu.matmul %200, %150, %cst_107 {dimension_numbers = #tpu.dot_dimension_numbers<[1], [0], [0], [1], [0, 0, 1, 1], [], []>} : vector<8x128xbf16>, vector<128x128xbf16>, vector<8x128xf32> -> vector<8x128xf32>
    %202 = arith.index_cast %c3_i32_106 : i32 to index
    %c0_108 = arith.constant 0 : index
    %c0_109 = arith.constant 0 : index
    %203 = vector.load %arg19[%202, %c0_108, %c0_109] : memref<8x8x128xf32, #tpu.memory_space<vmem>>, vector<1x8x128xf32>
    %204 = vector.shape_cast %203 : vector<1x8x128xf32> to vector<8x128xf32>
    %205 = arith.addf %201, %204 : vector<8x128xf32>
    %cst_110 = arith.constant 5.000000e-01 : f32
    %206 = vector.broadcast %cst_110 : f32 to vector<8x128xf32>
    %207 = arith.mulf %206, %195 : vector<8x128xf32>
    %208 = math.tanh %205 : vector<8x128xf32>
    %cst_111 = arith.constant 5.000000e-01 : f32
    %209 = vector.broadcast %cst_111 : f32 to vector<8x128xf32>
    %210 = arith.mulf %209, %208 : vector<8x128xf32>
    %211 = arith.addf %207, %210 : vector<8x128xf32>
    %212 = arith.index_cast %c3_i32_106 : i32 to index
    %c0_112 = arith.constant 0 : index
    %c0_113 = arith.constant 0 : index
    %213 = vector.load %arg15[%212, %c0_112, %c0_113] : memref<8x8x128xf32, #tpu.memory_space<vmem>>, vector<1x8x128xf32>
    %214 = vector.shape_cast %213 : vector<1x8x128xf32> to vector<8x128xf32>
    %215 = vector.shape_cast %211 : vector<8x128xf32> to vector<1x8x128xf32>
    tpu.vector_store %arg15[%212, %c0_112, %c0_113], %215 {strides = array<i32>} : memref<8x8x128xf32, #tpu.memory_space<vmem>>, vector<1x8x128xf32>,
    %c4_i32_114 = arith.constant 4 : i32
    %216 = arith.truncf %211 : vector<8x128xf32> to vector<8x128xbf16>
    %cst_115 = arith.constant dense<0.000000e+00> : vector<8x128xf32>
    %217 = tpu.matmul %216, %150, %cst_115 {dimension_numbers = #tpu.dot_dimension_numbers<[1], [0], [0], [1], [0, 0, 1, 1], [], []>} : vector<8x128xbf16>, vector<128x128xbf16>, vector<8x128xf32> -> vector<8x128xf32>
    %218 = arith.index_cast %c4_i32_114 : i32 to index
    %c0_116 = arith.constant 0 : index
    %c0_117 = arith.constant 0 : index
    %219 = vector.load %arg19[%218, %c0_116, %c0_117] : memref<8x8x128xf32, #tpu.memory_space<vmem>>, vector<1x8x128xf32>
    %220 = vector.shape_cast %219 : vector<1x8x128xf32> to vector<8x128xf32>
    %221 = arith.addf %217, %220 : vector<8x128xf32>
    %cst_118 = arith.constant 5.000000e-01 : f32
    %222 = vector.broadcast %cst_118 : f32 to vector<8x128xf32>
    %223 = arith.mulf %222, %211 : vector<8x128xf32>
    %224 = math.tanh %221 : vector<8x128xf32>
    %cst_119 = arith.constant 5.000000e-01 : f32
    %225 = vector.broadcast %cst_119 : f32 to vector<8x128xf32>
    %226 = arith.mulf %225, %224 : vector<8x128xf32>
    %227 = arith.addf %223, %226 : vector<8x128xf32>
    %228 = arith.index_cast %c4_i32_114 : i32 to index
    %c0_120 = arith.constant 0 : index
    %c0_121 = arith.constant 0 : index
    %229 = vector.load %arg15[%228, %c0_120, %c0_121] : memref<8x8x128xf32, #tpu.memory_space<vmem>>, vector<1x8x128xf32>
    %230 = vector.shape_cast %229 : vector<1x8x128xf32> to vector<8x128xf32>
    %231 = vector.shape_cast %227 : vector<8x128xf32> to vector<1x8x128xf32>
    tpu.vector_store %arg15[%228, %c0_120, %c0_121], %231 {strides = array<i32>} : memref<8x8x128xf32, #tpu.memory_space<vmem>>, vector<1x8x128xf32>,
    %c5_i32_122 = arith.constant 5 : i32
    %232 = arith.truncf %227 : vector<8x128xf32> to vector<8x128xbf16>
    %cst_123 = arith.constant dense<0.000000e+00> : vector<8x128xf32>
    %233 = tpu.matmul %232, %150, %cst_123 {dimension_numbers = #tpu.dot_dimension_numbers<[1], [0], [0], [1], [0, 0, 1, 1], [], []>} : vector<8x128xbf16>, vector<128x128xbf16>, vector<8x128xf32> -> vector<8x128xf32>
    %234 = arith.index_cast %c5_i32_122 : i32 to index
    %c0_124 = arith.constant 0 : index
    %c0_125 = arith.constant 0 : index
    %235 = vector.load %arg19[%234, %c0_124, %c0_125] : memref<8x8x128xf32, #tpu.memory_space<vmem>>, vector<1x8x128xf32>
    %236 = vector.shape_cast %235 : vector<1x8x128xf32> to vector<8x128xf32>
    %237 = arith.addf %233, %236 : vector<8x128xf32>
    %cst_126 = arith.constant 5.000000e-01 : f32
    %238 = vector.broadcast %cst_126 : f32 to vector<8x128xf32>
    %239 = arith.mulf %238, %227 : vector<8x128xf32>
    %240 = math.tanh %237 : vector<8x128xf32>
    %cst_127 = arith.constant 5.000000e-01 : f32
    %241 = vector.broadcast %cst_127 : f32 to vector<8x128xf32>
    %242 = arith.mulf %241, %240 : vector<8x128xf32>
    %243 = arith.addf %239, %242 : vector<8x128xf32>
    %244 = arith.index_cast %c5_i32_122 : i32 to index
    %c0_128 = arith.constant 0 : index
    %c0_129 = arith.constant 0 : index
    %245 = vector.load %arg15[%244, %c0_128, %c0_129] : memref<8x8x128xf32, #tpu.memory_space<vmem>>, vector<1x8x128xf32>
    %246 = vector.shape_cast %245 : vector<1x8x128xf32> to vector<8x128xf32>
    %247 = vector.shape_cast %243 : vector<8x128xf32> to vector<1x8x128xf32>
    tpu.vector_store %arg15[%244, %c0_128, %c0_129], %247 {strides = array<i32>} : memref<8x8x128xf32, #tpu.memory_space<vmem>>, vector<1x8x128xf32>,
    %c6_i32_130 = arith.constant 6 : i32
    %248 = arith.truncf %243 : vector<8x128xf32> to vector<8x128xbf16>
    %cst_131 = arith.constant dense<0.000000e+00> : vector<8x128xf32>
    %249 = tpu.matmul %248, %150, %cst_131 {dimension_numbers = #tpu.dot_dimension_numbers<[1], [0], [0], [1], [0, 0, 1, 1], [], []>} : vector<8x128xbf16>, vector<128x128xbf16>, vector<8x128xf32> -> vector<8x128xf32>
    %250 = arith.index_cast %c6_i32_130 : i32 to index
    %c0_132 = arith.constant 0 : index
    %c0_133 = arith.constant 0 : index
    %251 = vector.load %arg19[%250, %c0_132, %c0_133] : memref<8x8x128xf32, #tpu.memory_space<vmem>>, vector<1x8x128xf32>
    %252 = vector.shape_cast %251 : vector<1x8x128xf32> to vector<8x128xf32>
    %253 = arith.addf %249, %252 : vector<8x128xf32>
    %cst_134 = arith.constant 5.000000e-01 : f32
    %254 = vector.broadcast %cst_134 : f32 to vector<8x128xf32>
    %255 = arith.mulf %254, %243 : vector<8x128xf32>
    %256 = math.tanh %253 : vector<8x128xf32>
    %cst_135 = arith.constant 5.000000e-01 : f32
    %257 = vector.broadcast %cst_135 : f32 to vector<8x128xf32>
    %258 = arith.mulf %257, %256 : vector<8x128xf32>
    %259 = arith.addf %255, %258 : vector<8x128xf32>
    %260 = arith.index_cast %c6_i32_130 : i32 to index
    %c0_136 = arith.constant 0 : index
    %c0_137 = arith.constant 0 : index
    %261 = vector.load %arg15[%260, %c0_136, %c0_137] : memref<8x8x128xf32, #tpu.memory_space<vmem>>, vector<1x8x128xf32>
    %262 = vector.shape_cast %261 : vector<1x8x128xf32> to vector<8x128xf32>
    %263 = vector.shape_cast %259 : vector<8x128xf32> to vector<1x8x128xf32>
    tpu.vector_store %arg15[%260, %c0_136, %c0_137], %263 {strides = array<i32>} : memref<8x8x128xf32, #tpu.memory_space<vmem>>, vector<1x8x128xf32>,
    %c7_i32_138 = arith.constant 7 : i32
    %264 = arith.truncf %259 : vector<8x128xf32> to vector<8x128xbf16>
    %cst_139 = arith.constant dense<0.000000e+00> : vector<8x128xf32>
    %265 = tpu.matmul %264, %150, %cst_139 {dimension_numbers = #tpu.dot_dimension_numbers<[1], [0], [0], [1], [0, 0, 1, 1], [], []>} : vector<8x128xbf16>, vector<128x128xbf16>, vector<8x128xf32> -> vector<8x128xf32>
    %266 = arith.index_cast %c7_i32_138 : i32 to index
    %c0_140 = arith.constant 0 : index
    %c0_141 = arith.constant 0 : index
    %267 = vector.load %arg19[%266, %c0_140, %c0_141] : memref<8x8x128xf32, #tpu.memory_space<vmem>>, vector<1x8x128xf32>
    %268 = vector.shape_cast %267 : vector<1x8x128xf32> to vector<8x128xf32>
    %269 = arith.addf %265, %268 : vector<8x128xf32>
    %cst_142 = arith.constant 5.000000e-01 : f32
    %270 = vector.broadcast %cst_142 : f32 to vector<8x128xf32>
    %271 = arith.mulf %270, %259 : vector<8x128xf32>
    %272 = math.tanh %269 : vector<8x128xf32>
    %cst_143 = arith.constant 5.000000e-01 : f32
    %273 = vector.broadcast %cst_143 : f32 to vector<8x128xf32>
    %274 = arith.mulf %273, %272 : vector<8x128xf32>
    %275 = arith.addf %271, %274 : vector<8x128xf32>
    %276 = arith.index_cast %c7_i32_138 : i32 to index
    %c0_144 = arith.constant 0 : index
    %c0_145 = arith.constant 0 : index
    %277 = vector.load %arg15[%276, %c0_144, %c0_145] : memref<8x8x128xf32, #tpu.memory_space<vmem>>, vector<1x8x128xf32>
    %278 = vector.shape_cast %277 : vector<1x8x128xf32> to vector<8x128xf32>
    %279 = vector.shape_cast %275 : vector<8x128xf32> to vector<1x8x128xf32>
    tpu.vector_store %arg15[%276, %c0_144, %c0_145], %279 {strides = array<i32>} : memref<8x8x128xf32, #tpu.memory_space<vmem>>, vector<1x8x128xf32>,
    %c8_i32_146 = arith.constant 8 : i32
    %c0_147 = arith.constant 0 : index
    %c0_148 = arith.constant 0 : index
    %280 = vector.load %arg17[%c0_147, %c0_148] : memref<8x128xf32, #tpu.memory_space<vmem>>, vector<8x128xf32>
    tpu.vector_store %arg17[%c0_147, %c0_148], %275 {strides = array<i32>} : memref<8x128xf32, #tpu.memory_space<vmem>>, vector<8x128xf32>,
    %281 = arith.truncf %275 : vector<8x128xf32> to vector<8x128xbf16>
    %c0_149 = arith.constant 0 : index
    %c0_150 = arith.constant 0 : index
    %282 = vector.load %arg8[%c0_149, %c0_150] : memref<128x128xbf16, #tpu.memory_space<vmem>>, vector<128x128xbf16>
    %cst_151 = arith.constant dense<0.000000e+00> : vector<8x128xf32>
    %283 = tpu.matmul %281, %282, %cst_151 {dimension_numbers = #tpu.dot_dimension_numbers<[1], [0], [0], [1], [0, 0, 1, 1], [], []>} : vector<8x128xbf16>, vector<128x128xbf16>, vector<8x128xf32> -> vector<8x128xf32>
    %c0_152 = arith.constant 0 : index
    %c0_153 = arith.constant 0 : index
    %284 = vector.load %arg9[%c0_152, %c0_153] : memref<1x128xf32, #tpu.memory_space<vmem>>, vector<1x128xf32>
    %285 = vector.broadcast %284 : vector<1x128xf32> to vector<8x128xf32>
    %286 = arith.addf %283, %285 : vector<8x128xf32>
    %c0_154 = arith.constant 0 : index
    %c0_155 = arith.constant 0 : index
    %287 = vector.load %arg16[%c0_154, %c0_155] : memref<8x128xf32, #tpu.memory_space<vmem>>, vector<8x128xf32>
    tpu.vector_store %arg16[%c0_154, %c0_155], %286 {strides = array<i32>} : memref<8x128xf32, #tpu.memory_space<vmem>>, vector<8x128xf32>,
    %288 = arith.truncf %275 : vector<8x128xf32> to vector<8x128xbf16>
    %c0_156 = arith.constant 0 : index
    %c0_157 = arith.constant 0 : index
    %289 = vector.load %arg10[%c0_156, %c0_157] : memref<128x128xbf16, #tpu.memory_space<vmem>>, vector<128x128xbf16>
    %cst_158 = arith.constant dense<0.000000e+00> : vector<8x128xf32>
    %290 = tpu.matmul %288, %289, %cst_158 {dimension_numbers = #tpu.dot_dimension_numbers<[1], [0], [0], [1], [0, 0, 1, 1], [], []>} : vector<8x128xbf16>, vector<128x128xbf16>, vector<8x128xf32> -> vector<8x128xf32>
    %c0_159 = arith.constant 0 : index
    %c0_160 = arith.constant 0 : index
    %291 = vector.load %arg11[%c0_159, %c0_160] : memref<1x128xf32, #tpu.memory_space<vmem>>, vector<1x128xf32>
    %292 = vector.broadcast %291 : vector<1x128xf32> to vector<8x128xf32>
    %293 = arith.addf %290, %292 : vector<8x128xf32>
    %cst_161 = arith.constant 0.000000e+00 : f32
    %294 = vector.broadcast %cst_161 : f32 to vector<8x128xf32>
    %295 = arith.maximumf %293, %294 : vector<8x128xf32>
    %c0_162 = arith.constant 0 : index
    %c0_163 = arith.constant 0 : index
    %296 = vector.load %arg12[%c0_162, %c0_163] : memref<1x128xf32, #tpu.memory_space<vmem>>, vector<1x128xf32>
    %297 = vector.broadcast %296 : vector<1x128xf32> to vector<8x128xf32>
    %298 = arith.mulf %295, %297 : vector<8x128xf32>
    %cst_164 = arith.constant dense<0.000000e+00> : vector<8xf32>
    %299 = vector.multi_reduction <add>, %298, %cst_164 [1] : vector<8x128xf32> to vector<8xf32>
    %300 = vector.shape_cast %299 : vector<8xf32> to vector<8x1xf32>
    %c0_165 = arith.constant 0 : index
    %c0_166 = arith.constant 0 : index
    %301 = vector.load %arg13[%c0_165, %c0_166] : memref<1x1xf32, #tpu.memory_space<vmem>>, vector<1x1xf32>
    %302 = vector.broadcast %301 : vector<1x1xf32> to vector<8x1xf32>
    %303 = arith.addf %300, %302 : vector<8x1xf32>
    %304 = arith.negf %303 : vector<8x1xf32>
    %305 = math.exp %304 : vector<8x1xf32>
    %cst_167 = arith.constant 1.000000e+00 : f32
    %306 = vector.broadcast %cst_167 : f32 to vector<8x1xf32>
    %307 = arith.addf %306, %305 : vector<8x1xf32>
    %308 = arith.divf %306, %307 : vector<8x1xf32>
    %309 = tpu.iota {dimensions = array<i32: 1>} : vector<8x128xi32>
    %c8_i32_168 = arith.constant 8 : i32
    %310 = vector.broadcast %c8_i32_168 : i32 to vector<8x128xi32>
    %311 = arith.cmpi slt, %309, %310 : vector<8x128xi32>
    %cst_169 = arith.constant -1.000000e+30 : f32
    %312 = vector.broadcast %cst_169 : f32 to vector<8x128xf32>
    %313 = arith.select %311, %286, %312 : vector<8x128xi1>, vector<8x128xf32>
    %cst_170 = arith.constant dense<0xFF800000> : vector<8xf32>
    %314 = vector.multi_reduction <maximumf>, %313, %cst_170 [1] : vector<8x128xf32> to vector<8xf32>
    %315 = vector.shape_cast %314 : vector<8xf32> to vector<8x1xf32>
    %316 = vector.broadcast %315 : vector<8x1xf32> to vector<8x128xf32>
    %317 = arith.subf %313, %316 : vector<8x128xf32>
    %318 = math.exp %317 : vector<8x128xf32>
    %cst_171 = arith.constant dense<0.000000e+00> : vector<8xf32>
    %319 = vector.multi_reduction <add>, %318, %cst_171 [1] : vector<8x128xf32> to vector<8xf32>
    %320 = vector.shape_cast %319 : vector<8xf32> to vector<8x1xf32>
    %321 = tpu.reciprocal %320 {approx = true} : vector<8x1xf32> -> vector<8x1xf32>
    %322 = tpu.iota {dimensions = array<i32: 1>} : vector<8x128xi32>
    %c0_i32_172 = arith.constant 0 : i32
    %323 = vector.broadcast %c0_i32_172 : i32 to vector<8x128xi32>
    %324 = arith.cmpi eq, %322, %323 : vector<8x128xi32>
    %c1_i32_173 = arith.constant 1 : i32
    %325 = vector.broadcast %c1_i32_173 : i32 to vector<8x128xi32>
    %326 = arith.cmpi eq, %322, %325 : vector<8x128xi32>
    %cst_174 = arith.constant 0.000000e+00 : f32
    %327 = vector.shape_cast %308 : vector<8x1xf32> to vector<8x1xf32>
    %328 = vector.broadcast %327 : vector<8x1xf32> to vector<8x128xf32>
    %329 = vector.broadcast %cst_174 : f32 to vector<8x128xf32>
    %330 = arith.select %326, %328, %329 : vector<8x128xi1>, vector<8x128xf32>
    %331 = vector.shape_cast %321 : vector<8x1xf32> to vector<8x1xf32>
    %332 = vector.broadcast %331 : vector<8x1xf32> to vector<8x128xf32>
    %333 = arith.select %324, %332, %330 : vector<8x128xi1>, vector<8x128xf32>
    %c0_175 = arith.constant 0 : index
    %c0_176 = arith.constant 0 : index
    %334 = vector.load %arg18[%c0_175, %c0_176] : memref<8x128xf32, #tpu.memory_space<vmem>>, vector<8x128xf32>
    tpu.vector_store %arg18[%c0_175, %c0_176], %333 {strides = array<i32>} : memref<8x128xf32, #tpu.memory_space<vmem>>, vector<8x128xf32>,
    return
  }
  func.func @transform_0(%arg0: i32) -> (i32, i32, i32) {
    %c0_i32 = arith.constant 0 : i32
    %c0_i32_0 = arith.constant 0 : i32
    %c0_i32_1 = arith.constant 0 : i32
    return %c0_i32, %arg0, %c0_i32_0 : i32, i32, i32
  }
  func.func @transform_1(%arg0: i32) -> (i32, i32) {
    %c0_i32 = arith.constant 0 : i32
    %c0_i32_0 = arith.constant 0 : i32
    %c0_i32_1 = arith.constant 0 : i32
    return %c0_i32, %c0_i32_0 : i32, i32
  }
  func.func @transform_2(%arg0: i32) -> (i32, i32) {
    %c0_i32 = arith.constant 0 : i32
    %c0_i32_0 = arith.constant 0 : i32
    %c0_i32_1 = arith.constant 0 : i32
    return %c0_i32, %c0_i32_0 : i32, i32
  }
  func.func @transform_3(%arg0: i32) -> (i32, i32) {
    %c0_i32 = arith.constant 0 : i32
    %c0_i32_0 = arith.constant 0 : i32
    %c0_i32_1 = arith.constant 0 : i32
    return %c0_i32, %c0_i32_0 : i32, i32
  }
  func.func @transform_4(%arg0: i32) -> (i32, i32) {
    %c0_i32 = arith.constant 0 : i32
    %c0_i32_0 = arith.constant 0 : i32
    %c0_i32_1 = arith.constant 0 : i32
    return %c0_i32, %c0_i32_0 : i32, i32
  }
  func.func @transform_5(%arg0: i32) -> (i32, i32) {
    %c0_i32 = arith.constant 0 : i32
    %c0_i32_0 = arith.constant 0 : i32
    %c0_i32_1 = arith.constant 0 : i32
    return %c0_i32, %c0_i32_0 : i32, i32
  }
  func.func @transform_6(%arg0: i32) -> (i32, i32) {
    %c0_i32 = arith.constant 0 : i32
    %c0_i32_0 = arith.constant 0 : i32
    %c0_i32_1 = arith.constant 0 : i32
    return %c0_i32, %c0_i32_0 : i32, i32
  }
  func.func @transform_7(%arg0: i32) -> (i32, i32) {
    %c0_i32 = arith.constant 0 : i32
    %c0_i32_0 = arith.constant 0 : i32
    %c0_i32_1 = arith.constant 0 : i32
    return %c0_i32, %c0_i32_0 : i32, i32
  }
  func.func @transform_8(%arg0: i32) -> (i32, i32) {
    %c0_i32 = arith.constant 0 : i32
    %c0_i32_0 = arith.constant 0 : i32
    %c0_i32_1 = arith.constant 0 : i32
    return %c0_i32, %c0_i32_0 : i32, i32
  }
  func.func @transform_9(%arg0: i32) -> (i32, i32) {
    %c0_i32 = arith.constant 0 : i32
    %c0_i32_0 = arith.constant 0 : i32
    %c0_i32_1 = arith.constant 0 : i32
    return %c0_i32, %c0_i32_0 : i32, i32
  }
  func.func @transform_10(%arg0: i32) -> (i32, i32) {
    %c0_i32 = arith.constant 0 : i32
    %c0_i32_0 = arith.constant 0 : i32
    %c0_i32_1 = arith.constant 0 : i32
    return %c0_i32, %c0_i32_0 : i32, i32
  }
  func.func @transform_11(%arg0: i32) -> (i32, i32) {
    %c0_i32 = arith.constant 0 : i32
    %c0_i32_0 = arith.constant 0 : i32
    %c0_i32_1 = arith.constant 0 : i32
    return %c0_i32, %c0_i32_0 : i32, i32
  }
  func.func @transform_12(%arg0: i32) -> (i32, i32) {
    %c0_i32 = arith.constant 0 : i32
    %c0_i32_0 = arith.constant 0 : i32
    %c0_i32_1 = arith.constant 0 : i32
    return %c0_i32, %c0_i32_0 : i32, i32
  }
  func.func @transform_13(%arg0: i32) -> (i32, i32, i32) {
    %c0_i32 = arith.constant 0 : i32
    %c0_i32_0 = arith.constant 0 : i32
    %c0_i32_1 = arith.constant 0 : i32
    return %c0_i32, %arg0, %c0_i32_0 : i32, i32, i32
  }
  func.func @transform_14(%arg0: i32) -> (i32, i32, i32) {
    %c0_i32 = arith.constant 0 : i32
    %c0_i32_0 = arith.constant 0 : i32
    %c0_i32_1 = arith.constant 0 : i32
    return %c0_i32, %arg0, %c0_i32_0 : i32, i32, i32
  }
  func.func @transform_15(%arg0: i32) -> (i32, i32) {
    %c0_i32 = arith.constant 0 : i32
    %c0_i32_0 = arith.constant 0 : i32
    return %arg0, %c0_i32 : i32, i32
  }
  func.func @transform_16(%arg0: i32) -> (i32, i32) {
    %c0_i32 = arith.constant 0 : i32
    %c0_i32_0 = arith.constant 0 : i32
    return %arg0, %c0_i32 : i32, i32
  }
  func.func @transform_17(%arg0: i32) -> (i32, i32) {
    %c0_i32 = arith.constant 0 : i32
    %c0_i32_0 = arith.constant 0 : i32
    return %arg0, %c0_i32 : i32, i32
  }
}

</mosaic_0001>

<llo_original>
// kernel: tpu_custom_call.1
$region0: #{tpu_custom_call.1}
  #allocation0 [shape = 'u32[]', space=smem, size = 0x4, offset = 0x4, fixed_abs, tag = 'smem constant byte address 0x4 - core index']
  #allocation1 [shape = 'u32[72,128]{1,0:T(1,128)}', space=vmem, size = 0x9000, scoped, tag = 'internal scratch']
  #allocation2 [shape = 'f32[8,8,128]{2,1,0:T(8,128)}', space=vmem, size = 0x8000, scoped, tag = 'scratch operand']
  #allocation3 [shape = 'f32[1,1]{1,0:T(1,128)S(1)}', space=vmem, size = 0x200, scoped, tag = 'scoped memory for tpu_custom_call.1']
  %s0 = inlined_call_operand.hbm [shape: f32[8,8,128], index: 0, kind: input, shape index: {}]
  %s1 = inlined_call_operand.hbm [shape: bf16[128,128], index: 1, kind: input, shape index: {}]
  %s2 = inlined_call_operand.hbm [shape: bf16[128,128], index: 2, kind: input, shape index: {}]
  %s3 = inlined_call_operand.vmem [shape: f32[1,128], index: 3, kind: input, shape index: {}]
  %s4 = inlined_call_operand.hbm [shape: bf16[128,128], index: 4, kind: input, shape index: {}]
  %s5 = inlined_call_operand.hbm [shape: bf16[128,128], index: 5, kind: input, shape index: {}]
  %s6 = inlined_call_operand.vmem [shape: f32[1,128], index: 6, kind: input, shape index: {}]
  %s7 = inlined_call_operand.hbm [shape: bf16[128,128], index: 7, kind: input, shape index: {}]
  %s8 = inlined_call_operand.vmem [shape: f32[1,128], index: 8, kind: input, shape index: {}]
  %s9 = inlined_call_operand.hbm [shape: bf16[128,128], index: 9, kind: input, shape index: {}]
  %s10 = inlined_call_operand.vmem [shape: f32[1,128], index: 10, kind: input, shape index: {}]
  %s11 = inlined_call_operand.vmem [shape: f32[1,128], index: 11, kind: input, shape index: {}]
  %s12 = inlined_call_operand.<no memory space> [shape: f32[1,1], index: 12, kind: input, shape index: {}]
  %s13 = inlined_call_operand.hbm [shape: f32[8,8,128], index: 13, kind: output, shape index: {0}]
  %s14 = inlined_call_operand.hbm [shape: f32[8,8,128], index: 14, kind: output, shape index: {1}]
  %s15 = inlined_call_operand.hbm [shape: f32[8,128], index: 15, kind: output, shape index: {2}]
  %s16 = inlined_call_operand.hbm [shape: f32[8,128], index: 16, kind: output, shape index: {3}]
  %s17 = inlined_call_operand.hbm [shape: f32[8,128], index: 17, kind: output, shape index: {4}]
  %18 = xla_tuple %s13, %s14, %s15, %s16, %s17
  %s19 = sld [smem:[#allocation0]]
  $region122: #{tpu_custom_call.1} parent=0
    _
  %s21 = ssub.s32 1, %s19
  %s22 = scalar_select 0, %s21, %s19
  %v23 = vstv %s12
  %24 = vst [vmem:[#allocation3] sm:$0x1] %v23
  $region1: #{tpu_custom_call.1} parent=0
    #allocation4 [shape = 'u8[32768]{0}', space=vmem, size = 0x8000, scoped, tag = 'input window, operand 0, single buffered']
    #allocation5 [shape = 's32[1]{0}', space=sflag, size = 0x4, scoped, tag = 'scoped memory for tpu_custom_call.1']
    #allocation6 [shape = 's32[1]{0}', space=sflag, size = 0x4, scoped, tag = 'scoped memory for tpu_custom_call.1']
    #allocation7 [shape = 'u8[32768]{0}', space=vmem, size = 0x8000, scoped, tag = 'input window, operand 1, single buffered']
    #allocation8 [shape = 's32[1]{0}', space=sflag, size = 0x4, scoped, tag = 'scoped memory for tpu_custom_call.1']
    #allocation9 [shape = 'u8[32768]{0}', space=vmem, size = 0x8000, scoped, tag = 'input window, operand 2, single buffered']
    #allocation10 [shape = 'u8[32768]{0}', space=vmem, size = 0x8000, scoped, tag = 'input window, operand 4, single buffered']
    #allocation11 [shape = 's32[1]{0}', space=sflag, size = 0x4, scoped, tag = 'scoped memory for tpu_custom_call.1']
    #allocation12 [shape = 'u8[32768]{0}', space=vmem, size = 0x8000, scoped, tag = 'input window, operand 5, single buffered']
    #allocation13 [shape = 'u8[32768]{0}', space=vmem, size = 0x8000, scoped, tag = 'input window, operand 7, single buffered']
    #allocation14 [shape = 's32[1]{0}', space=sflag, size = 0x4, scoped, tag = 'scoped memory for tpu_custom_call.1']
    #allocation15 [shape = 'u8[32768]{0}', space=vmem, size = 0x8000, scoped, tag = 'input window, operand 9, single buffered']
    #allocation16 [shape = 'u8[32768]{0}', space=vmem, size = 0x8000, scoped, tag = 'output window, operand 0, single buffered']
    #allocation17 [shape = 'u8[32768]{0}', space=vmem, size = 0x8000, scoped, tag = 'output window, operand 1, single buffered']
    #allocation18 [shape = 's32[1]{0}', space=sflag, size = 0x4, scoped, tag = 'scoped memory for tpu_custom_call.1']
    #allocation19 [shape = 'u8[4096]{0}', space=vmem, size = 0x1000, scoped, tag = 'output window, operand 2, single buffered']
    #allocation20 [shape = 'u8[4096]{0}', space=vmem, size = 0x1000, scoped, tag = 'output window, operand 3, single buffered']
    #allocation21 [shape = 's32[1]{0}', space=sflag, size = 0x4, scoped, tag = 'scoped memory for tpu_custom_call.1']
    #allocation22 [shape = 'u8[4096]{0}', space=vmem, size = 0x1000, scoped, tag = 'output window, operand 4, single buffered']
    %25 = vsyncpa [#allocation5], 0
    %26 = vsyncpa [#allocation8], 0
    %27 = vsyncpa [#allocation11], 0
    %28 = vsyncpa [#allocation14], 0
    %29 = vsyncpa [#allocation6], 0
    %30 = vsyncpa [#allocation18], 0
    %31 = vsyncpa [#allocation21], 0
    // Predicated region
    $region2: #{tpu_custom_call.1} parent=1 // pred_check
      _
    $region3: #{tpu_custom_call.1} parent=1 // pred_check_branch
      %33 = sbr.rel (0) target = $region5
    $region4: #{tpu_custom_call.1} parent=1 // pred_region
      %35 = vsyncadd [#allocation5], 0
      %s36 = sshll.u32 %s0, 4
      %s37 = int_to_ptr.hbm [resolvable:$true] %s36
      %s38 = sshll.u32 [#allocation4], 4
      %s39 = int_to_ptr.vmem [resolvable:$true] %s38
      %44 = dma.hbm_to_vmem [thread:$0]  %s37, 1024, %s39, [#allocation5], 128, 128, 8
    $region5: #{tpu_custom_call.1} parent=1 // pred_fallthru
      _
    // Predicated region
    $region6: #{tpu_custom_call.1} parent=1 // pred_check
      _
    $region7: #{tpu_custom_call.1} parent=1 // pred_check_branch
      %46 = sbr.rel (0) target = $region9
    $region8: #{tpu_custom_call.1} parent=1 // pred_region
      %48 = vsyncadd [#allocation8], 0
      %s49 = sshll.u32 %s1, 4
      %s50 = int_to_ptr.hbm [resolvable:$true] %s49
      %s51 = sshll.u32 [#allocation7], 4
      %s52 = int_to_ptr.vmem [resolvable:$true] %s51
      %57 = dma.hbm_to_vmem [thread:$0]  %s50, 1024, %s52, [#allocation8], 64, 64, 4
    $region9: #{tpu_custom_call.1} parent=1 // pred_fallthru
      _
    // Predicated region
    $region10: #{tpu_custom_call.1} parent=1 // pred_check
      _
    $region11: #{tpu_custom_call.1} parent=1 // pred_check_branch
      %59 = sbr.rel (0) target = $region13
    $region12: #{tpu_custom_call.1} parent=1 // pred_region
      %61 = vsyncadd [#allocation8], 0
      %s62 = sshll.u32 %s2, 4
      %s63 = int_to_ptr.hbm [resolvable:$true] %s62
      %s64 = sshll.u32 [#allocation9], 4
      %s65 = int_to_ptr.vmem [resolvable:$true] %s64
      %70 = dma.hbm_to_vmem [thread:$0]  %s63, 1024, %s65, [#allocation8], 64, 64, 4
    $region13: #{tpu_custom_call.1} parent=1 // pred_fallthru
      _
    // Predicated region
    $region14: #{tpu_custom_call.1} parent=1 // pred_check
      _
    $region15: #{tpu_custom_call.1} parent=1 // pred_check_branch
      %72 = sbr.rel (0) target = $region17
    $region16: #{tpu_custom_call.1} parent=1 // pred_region
      _
    $region17: #{tpu_custom_call.1} parent=1 // pred_fallthru
      _
    // Predicated region
    $region18: #{tpu_custom_call.1} parent=1 // pred_check
      _
    $region19: #{tpu_custom_call.1} parent=1 // pred_check_branch
      %74 = sbr.rel (0) target = $region21
    $region20: #{tpu_custom_call.1} parent=1 // pred_region
      %76 = vsyncadd [#allocation11], 0
      %s77 = sshll.u32 %s4, 4
      %s78 = int_to_ptr.hbm [resolvable:$true] %s77
      %s79 = sshll.u32 [#allocation10], 4
      %s80 = int_to_ptr.vmem [resolvable:$true] %s79
      %85 = dma.hbm_to_vmem [thread:$0]  %s78, 1024, %s80, [#allocation11], 64, 64, 4
    $region21: #{tpu_custom_call.1} parent=1 // pred_fallthru
      _
    // Predicated region
    $region22: #{tpu_custom_call.1} parent=1 // pred_check
      _
    $region23: #{tpu_custom_call.1} parent=1 // pred_check_branch
      %87 = sbr.rel (0) target = $region25
    $region24: #{tpu_custom_call.1} parent=1 // pred_region
      %89 = vsyncadd [#allocation11], 0
      %s90 = sshll.u32 %s5, 4
      %s91 = int_to_ptr.hbm [resolvable:$true] %s90
      %s92 = sshll.u32 [#allocation12], 4
      %s93 = int_to_ptr.vmem [resolvable:$true] %s92
      %98 = dma.hbm_to_vmem [thread:$0]  %s91, 1024, %s93, [#allocation11], 64, 64, 4
    $region25: #{tpu_custom_call.1} parent=1 // pred_fallthru
      _
    // Predicated region
    $region26: #{tpu_custom_call.1} parent=1 // pred_check
      _
    $region27: #{tpu_custom_call.1} parent=1 // pred_check_branch
      %100 = sbr.rel (0) target = $region29
    $region28: #{tpu_custom_call.1} parent=1 // pred_region
      _
    $region29: #{tpu_custom_call.1} parent=1 // pred_fallthru
      _
    // Predicated region
    $region30: #{tpu_custom_call.1} parent=1 // pred_check
      _
    $region31: #{tpu_custom_call.1} parent=1 // pred_check_branch
      %102 = sbr.rel (0) target = $region33
    $region32: #{tpu_custom_call.1} parent=1 // pred_region
      %104 = vsyncadd [#allocation14], 0
      %s105 = sshll.u32 %s7, 4
      %s106 = int_to_ptr.hbm [resolvable:$true] %s105
      %s107 = sshll.u32 [#allocation13], 4
      %s108 = int_to_ptr.vmem [resolvable:$true] %s107
      %113 = dma.hbm_to_vmem [thread:$0]  %s106, 1024, %s108, [#allocation14], 64, 64, 4
    $region33: #{tpu_custom_call.1} parent=1 // pred_fallthru
      _
    // Predicated region
    $region34: #{tpu_custom_call.1} parent=1 // pred_check
      _
    $region35: #{tpu_custom_call.1} parent=1 // pred_check_branch
      %115 = sbr.rel (0) target = $region37
    $region36: #{tpu_custom_call.1} parent=1 // pred_region
      _
    $region37: #{tpu_custom_call.1} parent=1 // pred_fallthru
      _
    // Predicated region
    $region38: #{tpu_custom_call.1} parent=1 // pred_check
      _
    $region39: #{tpu_custom_call.1} parent=1 // pred_check_branch
      %117 = sbr.rel (0) target = $region41
    $region40: #{tpu_custom_call.1} parent=1 // pred_region
      %119 = vsyncadd [#allocation14], 0
      %s120 = sshll.u32 %s9, 4
      %s121 = int_to_ptr.hbm [resolvable:$true] %s120
      %s122 = sshll.u32 [#allocation15], 4
      %s123 = int_to_ptr.vmem [resolvable:$true] %s122
      %128 = dma.hbm_to_vmem [thread:$0]  %s121, 1024, %s123, [#allocation14], 64, 64, 4
    $region41: #{tpu_custom_call.1} parent=1 // pred_fallthru
      _
    // Predicated region
    $region42: #{tpu_custom_call.1} parent=1 // pred_check
      _
    $region43: #{tpu_custom_call.1} parent=1 // pred_check_branch
      %130 = sbr.rel (0) target = $region45
    $region44: #{tpu_custom_call.1} parent=1 // pred_region
      _
    $region45: #{tpu_custom_call.1} parent=1 // pred_fallthru
      _
    // Predicated region
    $region46: #{tpu_custom_call.1} parent=1 // pred_check
      _
    $region47: #{tpu_custom_call.1} parent=1 // pred_check_branch
      %132 = sbr.rel (0) target = $region49
    $region48: #{tpu_custom_call.1} parent=1 // pred_region
      _
    $region49: #{tpu_custom_call.1} parent=1 // pred_fallthru
      _
    // Predicated region
    $region50: #{tpu_custom_call.1} parent=1 // pred_check
      _
    $region51: #{tpu_custom_call.1} parent=1 // pred_check_branch
      %134 = sbr.rel (0) target = $region53
    $region52: #{tpu_custom_call.1} parent=1 // pred_region
      _
    $region53: #{tpu_custom_call.1} parent=1 // pred_fallthru
      _
    // Predicated region
    $region54: #{tpu_custom_call.1} parent=1 // pred_check
      _
    $region55: #{tpu_custom_call.1} parent=1 // pred_check_branch
      %136 = sbr.rel (0) target = $region57
    $region56: #{tpu_custom_call.1} parent=1 // pred_region
      %138 = dma.done [#allocation5], 1024
    $region57: #{tpu_custom_call.1} parent=1 // pred_fallthru
      _
    // Predicated region
    $region58: #{tpu_custom_call.1} parent=1 // pred_check
      _
    $region59: #{tpu_custom_call.1} parent=1 // pred_check_branch
      %140 = sbr.rel (0) target = $region61
    $region60: #{tpu_custom_call.1} parent=1 // pred_region
      %142 = dma.done [#allocation8], 1024
    $region61: #{tpu_custom_call.1} parent=1 // pred_fallthru
      _
    // Predicated region
    $region62: #{tpu_custom_call.1} parent=1 // pred_check
      _
    $region63: #{tpu_custom_call.1} parent=1 // pred_check_branch
      %144 = sbr.rel (0) target = $region65
    $region64: #{tpu_custom_call.1} parent=1 // pred_region
      %146 = dma.done [#allocation8], 1024
    $region65: #{tpu_custom_call.1} parent=1 // pred_fallthru
      _
    // Predicated region
    $region66: #{tpu_custom_call.1} parent=1 // pred_check
      _
    $region67: #{tpu_custom_call.1} parent=1 // pred_check_branch
      %148 = sbr.rel (0) target = $region69
    $region68: #{tpu_custom_call.1} parent=1 // pred_region
      %150 = dma.done [#allocation11], 1024
    $region69: #{tpu_custom_call.1} parent=1 // pred_fallthru
      _
    // Predicated region
    $region70: #{tpu_custom_call.1} parent=1 // pred_check
      _
    $region71: #{tpu_custom_call.1} parent=1 // pred_check_branch
      %152 = sbr.rel (0) target = $region73
    $region72: #{tpu_custom_call.1} parent=1 // pred_region
      %154 = dma.done [#allocation11], 1024
    $region73: #{tpu_custom_call.1} parent=1 // pred_fallthru
      _
    // Predicated region
    $region74: #{tpu_custom_call.1} parent=1 // pred_check
      _
    $region75: #{tpu_custom_call.1} parent=1 // pred_check_branch
      %156 = sbr.rel (0) target = $region77
    $region76: #{tpu_custom_call.1} parent=1 // pred_region
      %158 = dma.done [#allocation14], 1024
    $region77: #{tpu_custom_call.1} parent=1 // pred_fallthru
      _
    // Predicated region
    $region78: #{tpu_custom_call.1} parent=1 // pred_check
      _
    $region79: #{tpu_custom_call.1} parent=1 // pred_check_branch
      %160 = sbr.rel (0) target = $region81
    $region80: #{tpu_custom_call.1} parent=1 // pred_region
      %162 = dma.done [#allocation14], 1024
    $region81: #{tpu_custom_call.1} parent=1 // pred_fallthru
      _
    %v164 = vld [vmem:[#allocation4] sm:$0xff]
    %v165 = vld [vmem:[#allocation4 + $0x8] sm:$0xff]
    %v166 = vld [vmem:[#allocation4 + $0x10] sm:$0xff]
    %v167 = vld [vmem:[#allocation4 + $0x18] sm:$0xff]
    %v168 = vld [vmem:[#allocation4 + $0x20] sm:$0xff]
    %v169 = vld [vmem:[#allocation4 + $0x28] sm:$0xff]
    %v170 = vld [vmem:[#allocation4 + $0x30] sm:$0xff]
    %v171 = vld [vmem:[#allocation4 + $0x38] sm:$0xff]
    %v172 = vpack.c.bf16 %v164, %v164
    %v173 = vpack.c.bf16 %v165, %v165
    %v174 = vpack.c.bf16 %v166, %v166
    %v175 = vpack.c.bf16 %v167, %v167
    %v176 = vpack.c.bf16 %v168, %v168
    %v177 = vpack.c.bf16 %v169, %v169
    %v178 = vpack.c.bf16 %v170, %v170
    %v179 = vpack.c.bf16 %v171, %v171
    %v180 = vld [vmem:[#allocation7] sm:$0xf]
    %v181 = vld [vmem:[#allocation7 + $0x4] sm:$0xf]
    %v182 = vld [vmem:[#allocation7 + $0x8] sm:$0xf]
    %v183 = vld [vmem:[#allocation7 + $0xc] sm:$0xf]
    %v184 = vld [vmem:[#allocation7 + $0x10] sm:$0xf]
    %v185 = vld [vmem:[#allocation7 + $0x14] sm:$0xf]
    %v186 = vld [vmem:[#allocation7 + $0x18] sm:$0xf]
    %v187 = vld [vmem:[#allocation7 + $0x1c] sm:$0xf]
    %v188 = vld [vmem:[#allocation7 + $0x20] sm:$0xf]
    %v189 = vld [vmem:[#allocation7 + $0x24] sm:$0xf]
    %v190 = vld [vmem:[#allocation7 + $0x28] sm:$0xf]
    %v191 = vld [vmem:[#allocation7 + $0x2c] sm:$0xf]
    %v192 = vld [vmem:[#allocation7 + $0x30] sm:$0xf]
    %v193 = vld [vmem:[#allocation7 + $0x34] sm:$0xf]
    %v194 = vld [vmem:[#allocation7 + $0x38] sm:$0xf]
    %v195 = vld [vmem:[#allocation7 + $0x3c] sm:$0xf]
    %v196 = vld [vmem:[%s3] sm:$0x1]
    %v198 = vperm.slane %v196, 0
    %v208 = vunpack.c.l.b16 %v172
    %v209 = vunpack.c.l.b16 %v173
    %v210 = vunpack.c.l.b16 %v174
    %v211 = vunpack.c.l.b16 %v175
    %v212 = vunpack.c.l.b16 %v176
    %v213 = vunpack.c.l.b16 %v177
    %v214 = vunpack.c.l.b16 %v178
    %v215 = vunpack.c.l.b16 %v179
    %v216 = vpack.c.b16 %v209, %v208
    %v217 = vpack.c.b16 %v211, %v210
    %v218 = vpack.c.b16 %v213, %v212
    %v219 = vpack.c.b16 %v215, %v214
    %v240 = vunpack.c.l.b16 %v180
    %v241 = vunpack.c.l.b16 %v181
    %v242 = vunpack.c.l.b16 %v182
    %v243 = vunpack.c.l.b16 %v183
    %v244 = vunpack.c.l.b16 %v184
    %v245 = vunpack.c.l.b16 %v185
    %v246 = vunpack.c.l.b16 %v186
    %v247 = vunpack.c.l.b16 %v187
    %v248 = vunpack.c.l.b16 %v188
    %v249 = vunpack.c.l.b16 %v189
    %v250 = vunpack.c.l.b16 %v190
    %v251 = vunpack.c.l.b16 %v191
    %v252 = vunpack.c.l.b16 %v192
    %v253 = vunpack.c.l.b16 %v193
    %v254 = vunpack.c.l.b16 %v194
    %v255 = vunpack.c.l.b16 %v195
    %v256 = vpack.c.b16 %v241, %v240
    %v257 = vpack.c.b16 %v243, %v242
    %v258 = vpack.c.b16 %v245, %v244
    %v259 = vpack.c.b16 %v247, %v246
    %v260 = vpack.c.b16 %v249, %v248
    %v261 = vpack.c.b16 %v251, %v250
    %v262 = vpack.c.b16 %v253, %v252
    %v263 = vpack.c.b16 %v255, %v254
    %272 = vmatpush.bf16.msra.mxu0 %v263
    %273 = vmatpush.bf16.msra.mxu0 %v262
    %274 = vmatpush.bf16.msra.mxu0 %v261
    %275 = vmatpush.bf16.msra.mxu0 %v260
    %276 = vmatpush.bf16.msra.mxu0 %v259
    %277 = vmatpush.bf16.msra.mxu0 %v258
    %278 = vmatpush.bf16.msra.mxu0 %v257
    %279 = vmatpush.bf16.msra.mxu0 %v256
    %280 = vmatmul.bf16.gmra.mxu0 %v216
    %v281 = vpop.f32.mrf.mxu0
    %v282 = vadd.f32 %v198, %v281
    %v283 = vpop.f32.mrf.mxu0
    %v284 = vadd.f32 %v198, %v283
    %285 = vmatmul.bf16.gmra.mxu0 %v217
    %v286 = vpop.f32.mrf.mxu0
    %v287 = vadd.f32 %v198, %v286
    %v288 = vpop.f32.mrf.mxu0
    %v289 = vadd.f32 %v198, %v288
    %290 = vmatmul.bf16.gmra.mxu0 %v218
    %v291 = vpop.f32.mrf.mxu0
    %v292 = vadd.f32 %v198, %v291
    %v293 = vpop.f32.mrf.mxu0
    %v294 = vadd.f32 %v198, %v293
    %295 = vmatmul.bf16.gmra.mxu0 %v219
    %v296 = vpop.f32.mrf.mxu0
    %v297 = vadd.f32 %v198, %v296
    %v298 = vpop.f32.mrf.mxu0
    %v299 = vadd.f32 %v198, %v298
    %300 = vdwg.mxu0
    %301 = vst [vmem:[#allocation2] sm:$0xff] %v282
    %302 = vst [vmem:[#allocation2 + $0x8] sm:$0xff] %v284
    %303 = vst [vmem:[#allocation2 + $0x10] sm:$0xff] %v287
    %304 = vst [vmem:[#allocation2 + $0x18] sm:$0xff] %v289
    %305 = vst [vmem:[#allocation2 + $0x20] sm:$0xff] %v292
    %306 = vst [vmem:[#allocation2 + $0x28] sm:$0xff] %v294
    %307 = vst [vmem:[#allocation2 + $0x30] sm:$0xff] %v297
    %308 = vst [vmem:[#allocation2 + $0x38] sm:$0xff] %v299
    %v309 = vld [vmem:[#allocation9] sm:$0xf]
    %v310 = vld [vmem:[#allocation9 + $0x4] sm:$0xf]
    %v311 = vld [vmem:[#allocation9 + $0x8] sm:$0xf]
    %v312 = vld [vmem:[#allocation9 + $0xc] sm:$0xf]
    %v313 = vld [vmem:[#allocation9 + $0x10] sm:$0xf]
    %v314 = vld [vmem:[#allocation9 + $0x14] sm:$0xf]
    %v315 = vld [vmem:[#allocation9 + $0x18] sm:$0xf]
    %v316 = vld [vmem:[#allocation9 + $0x1c] sm:$0xf]
    %v317 = vld [vmem:[#allocation9 + $0x20] sm:$0xf]
    %v318 = vld [vmem:[#allocation9 + $0x24] sm:$0xf]
    %v319 = vld [vmem:[#allocation9 + $0x28] sm:$0xf]
    %v320 = vld [vmem:[#allocation9 + $0x2c] sm:$0xf]
    %v321 = vld [vmem:[#allocation9 + $0x30] sm:$0xf]
    %v322 = vld [vmem:[#allocation9 + $0x34] sm:$0xf]
    %v323 = vld [vmem:[#allocation9 + $0x38] sm:$0xf]
    %v324 = vld [vmem:[#allocation9 + $0x3c] sm:$0xf]
    %v325 = vld [vmem:[#allocation2] sm:$0xff]
    %v342 = vunpack.c.l.b16 %v309
    %v343 = vunpack.c.l.b16 %v310
    %v344 = vunpack.c.l.b16 %v311
    %v345 = vunpack.c.l.b16 %v312
    %v346 = vunpack.c.l.b16 %v313
    %v347 = vunpack.c.l.b16 %v314
    %v348 = vunpack.c.l.b16 %v315
    %v349 = vunpack.c.l.b16 %v316
    %v350 = vunpack.c.l.b16 %v317
    %v351 = vunpack.c.l.b16 %v318
    %v352 = vunpack.c.l.b16 %v319
    %v353 = vunpack.c.l.b16 %v320
    %v354 = vunpack.c.l.b16 %v321
    %v355 = vunpack.c.l.b16 %v322
    %v356 = vunpack.c.l.b16 %v323
    %v357 = vunpack.c.l.b16 %v324
    %v358 = vpack.c.b16 %v343, %v342
    %v359 = vpack.c.b16 %v345, %v344
    %v360 = vpack.c.b16 %v347, %v346
    %v361 = vpack.c.b16 %v349, %v348
    %v362 = vpack.c.b16 %v351, %v350
    %v363 = vpack.c.b16 %v353, %v352
    %v364 = vpack.c.b16 %v355, %v354
    %v365 = vpack.c.b16 %v357, %v356
    %374 = vmatpush.bf16.msra.mxu0 %v365
    %375 = vmatpush.bf16.msra.mxu0 %v364
    %376 = vmatpush.bf16.msra.mxu0 %v363
    %377 = vmatpush.bf16.msra.mxu0 %v362
    %378 = vmatpush.bf16.msra.mxu0 %v361
    %379 = vmatpush.bf16.msra.mxu0 %v360
    %380 = vmatpush.bf16.msra.mxu0 %v359
    %381 = vmatpush.bf16.msra.mxu0 %v358
    %382 = vmatmul.bf16.gmra.mxu0 0
    %v383 = vpop.f32.mrf.mxu0
    %v384 = vadd.f32 %v325, %v383
    %v385 = vpop.f32.mrf.mxu0
    %386 = vdwg.mxu0
    %v387 = vtanh.pop %v384
    %v388 = vmul.f32 %v387, 0.5
    %v389 = vadd.f32 %v388, 0.0
    %390 = vst [vmem:[#allocation16] sm:$0xff] %v389
    %v391 = vpack.c.bf16 %v389, %v389
    %s392 = scalar_lea.vmem [#allocation2], 8
    %v393 = vld [vmem:[%s392] sm:$0xff]
    %394 = vmatpush.bf16.msra.mxu0 %v365
    %395 = vmatpush.bf16.msra.mxu0 %v364
    %396 = vmatpush.bf16.msra.mxu0 %v363
    %397 = vmatpush.bf16.msra.mxu0 %v362
    %398 = vmatpush.bf16.msra.mxu0 %v361
    %399 = vmatpush.bf16.msra.mxu0 %v360
    %400 = vmatpush.bf16.msra.mxu0 %v359
    %401 = vmatpush.bf16.msra.mxu0 %v358
    %402 = vmatmul.bf16.gmra.mxu0 %v391
    %v403 = vpop.f32.mrf.mxu0
    %v404 = vadd.f32 %v393, %v403
    %v405 = vpop.f32.mrf.mxu0
    %406 = vdwg.mxu0
    %v407 = vmul.f32 %v389, 0.5
    %v408 = vtanh.pop %v404
    %v409 = vmul.f32 %v408, 0.5
    %v410 = vadd.f32 %v407, %v409
    %s411 = scalar_lea.vmem [#allocation16], 8
    %412 = vst [vmem:[%s411] sm:$0xff] %v410
    %v413 = vpack.c.bf16 %v410, %v410
    %s414 = scalar_lea.vmem [#allocation2], 16
    %v415 = vld [vmem:[%s414] sm:$0xff]
    %416 = vmatpush.bf16.msra.mxu0 %v365
    %417 = vmatpush.bf16.msra.mxu0 %v364
    %418 = vmatpush.bf16.msra.mxu0 %v363
    %419 = vmatpush.bf16.msra.mxu0 %v362
    %420 = vmatpush.bf16.msra.mxu0 %v361
    %421 = vmatpush.bf16.msra.mxu0 %v360
    %422 = vmatpush.bf16.msra.mxu0 %v359
    %423 = vmatpush.bf16.msra.mxu0 %v358
    %424 = vmatmul.bf16.gmra.mxu0 %v413
    %v425 = vpop.f32.mrf.mxu0
    %v426 = vadd.f32 %v415, %v425
    %v427 = vpop.f32.mrf.mxu0
    %428 = vdwg.mxu0
    %v429 = vmul.f32 %v410, 0.5
    %v430 = vtanh.pop %v426
    %v431 = vmul.f32 %v430, 0.5
    %v432 = vadd.f32 %v429, %v431
    %s433 = scalar_lea.vmem [#allocation16], 16
    %434 = vst [vmem:[%s433] sm:$0xff] %v432
    %v435 = vpack.c.bf16 %v432, %v432
    %s436 = scalar_lea.vmem [#allocation2], 24
    %v437 = vld [vmem:[%s436] sm:$0xff]
    %438 = vmatpush.bf16.msra.mxu0 %v365
    %439 = vmatpush.bf16.msra.mxu0 %v364
    %440 = vmatpush.bf16.msra.mxu0 %v363
    %441 = vmatpush.bf16.msra.mxu0 %v362
    %442 = vmatpush.bf16.msra.mxu0 %v361
    %443 = vmatpush.bf16.msra.mxu0 %v360
    %444 = vmatpush.bf16.msra.mxu0 %v359
    %445 = vmatpush.bf16.msra.mxu0 %v358
    %446 = vmatmul.bf16.gmra.mxu0 %v435
    %v447 = vpop.f32.mrf.mxu0
    %v448 = vadd.f32 %v437, %v447
    %v449 = vpop.f32.mrf.mxu0
    %450 = vdwg.mxu0
    %v451 = vmul.f32 %v432, 0.5
    %v452 = vtanh.pop %v448
    %v453 = vmul.f32 %v452, 0.5
    %v454 = vadd.f32 %v451, %v453
    %s455 = scalar_lea.vmem [#allocation16], 24
    %456 = vst [vmem:[%s455] sm:$0xff] %v454
    %v457 = vpack.c.bf16 %v454, %v454
    %s458 = scalar_lea.vmem [#allocation2], 32
    %v459 = vld [vmem:[%s458] sm:$0xff]
    %460 = vmatpush.bf16.msra.mxu0 %v365
    %461 = vmatpush.bf16.msra.mxu0 %v364
    %462 = vmatpush.bf16.msra.mxu0 %v363
    %463 = vmatpush.bf16.msra.mxu0 %v362
    %464 = vmatpush.bf16.msra.mxu0 %v361
    %465 = vmatpush.bf16.msra.mxu0 %v360
    %466 = vmatpush.bf16.msra.mxu0 %v359
    %467 = vmatpush.bf16.msra.mxu0 %v358
    %468 = vmatmul.bf16.gmra.mxu0 %v457
    %v469 = vpop.f32.mrf.mxu0
    %v470 = vadd.f32 %v459, %v469
    %v471 = vpop.f32.mrf.mxu0
    %472 = vdwg.mxu0
    %v473 = vmul.f32 %v454, 0.5
    %v474 = vtanh.pop %v470
    %v475 = vmul.f32 %v474, 0.5
    %v476 = vadd.f32 %v473, %v475
    %s477 = scalar_lea.vmem [#allocation16], 32
    %478 = vst [vmem:[%s477] sm:$0xff] %v476
    %v479 = vpack.c.bf16 %v476, %v476
    %s480 = scalar_lea.vmem [#allocation2], 40
    %v481 = vld [vmem:[%s480] sm:$0xff]
    %482 = vmatpush.bf16.msra.mxu0 %v365
    %483 = vmatpush.bf16.msra.mxu0 %v364
    %484 = vmatpush.bf16.msra.mxu0 %v363
    %485 = vmatpush.bf16.msra.mxu0 %v362
    %486 = vmatpush.bf16.msra.mxu0 %v361
    %487 = vmatpush.bf16.msra.mxu0 %v360
    %488 = vmatpush.bf16.msra.mxu0 %v359
    %489 = vmatpush.bf16.msra.mxu0 %v358
    %490 = vmatmul.bf16.gmra.mxu0 %v479
    %v491 = vpop.f32.mrf.mxu0
    %v492 = vadd.f32 %v481, %v491
    %v493 = vpop.f32.mrf.mxu0
    %494 = vdwg.mxu0
    %v495 = vmul.f32 %v476, 0.5
    %v496 = vtanh.pop %v492
    %v497 = vmul.f32 %v496, 0.5
    %v498 = vadd.f32 %v495, %v497
    %s499 = scalar_lea.vmem [#allocation16], 40
    %500 = vst [vmem:[%s499] sm:$0xff] %v498
    %v501 = vpack.c.bf16 %v498, %v498
    %s502 = scalar_lea.vmem [#allocation2], 48
    %v503 = vld [vmem:[%s502] sm:$0xff]
    %504 = vmatpush.bf16.msra.mxu0 %v365
    %505 = vmatpush.bf16.msra.mxu0 %v364
    %506 = vmatpush.bf16.msra.mxu0 %v363
    %507 = vmatpush.bf16.msra.mxu0 %v362
    %508 = vmatpush.bf16.msra.mxu0 %v361
    %509 = vmatpush.bf16.msra.mxu0 %v360
    %510 = vmatpush.bf16.msra.mxu0 %v359
    %511 = vmatpush.bf16.msra.mxu0 %v358
    %512 = vmatmul.bf16.gmra.mxu0 %v501
    %v513 = vpop.f32.mrf.mxu0
    %v514 = vadd.f32 %v503, %v513
    %v515 = vpop.f32.mrf.mxu0
    %516 = vdwg.mxu0
    %v517 = vmul.f32 %v498, 0.5
    %v518 = vtanh.pop %v514
    %v519 = vmul.f32 %v518, 0.5
    %v520 = vadd.f32 %v517, %v519
    %s521 = scalar_lea.vmem [#allocation16], 48
    %522 = vst [vmem:[%s521] sm:$0xff] %v520
    %v523 = vpack.c.bf16 %v520, %v520
    %s524 = scalar_lea.vmem [#allocation2], 56
    %v525 = vld [vmem:[%s524] sm:$0xff]
    %526 = vmatpush.bf16.msra.mxu0 %v365
    %527 = vmatpush.bf16.msra.mxu0 %v364
    %528 = vmatpush.bf16.msra.mxu0 %v363
    %529 = vmatpush.bf16.msra.mxu0 %v362
    %530 = vmatpush.bf16.msra.mxu0 %v361
    %531 = vmatpush.bf16.msra.mxu0 %v360
    %532 = vmatpush.bf16.msra.mxu0 %v359
    %533 = vmatpush.bf16.msra.mxu0 %v358
    %534 = vmatmul.bf16.gmra.mxu0 %v523
    %v535 = vpop.f32.mrf.mxu0
    %v536 = vadd.f32 %v525, %v535
    %v537 = vpop.f32.mrf.mxu0
    %538 = vdwg.mxu0
    %v539 = vmul.f32 %v520, 0.5
    %v540 = vtanh.pop %v536
    %v541 = vmul.f32 %v540, 0.5
    %v542 = vadd.f32 %v539, %v541
    %s543 = scalar_lea.vmem [#allocation16], 56
    %544 = vst [vmem:[%s543] sm:$0xff] %v542
    %v545 = vld [vmem:[#allocation16] sm:$0xff]
    %v546 = vld [vmem:[#allocation16 + $0x8] sm:$0xff]
    %v547 = vld [vmem:[#allocation16 + $0x10] sm:$0xff]
    %v548 = vld [vmem:[#allocation16 + $0x18] sm:$0xff]
    %v549 = vld [vmem:[#allocation16 + $0x20] sm:$0xff]
    %v550 = vld [vmem:[#allocation16 + $0x28] sm:$0xff]
    %v551 = vld [vmem:[#allocation16 + $0x30] sm:$0xff]
    %v552 = vld [vmem:[#allocation16 + $0x38] sm:$0xff]
    %v553 = vpack.c.bf16 %v545, %v545
    %v554 = vpack.c.bf16 %v546, %v546
    %v555 = vpack.c.bf16 %v547, %v547
    %v556 = vpack.c.bf16 %v548, %v548
    %v557 = vpack.c.bf16 %v549, %v549
    %v558 = vpack.c.bf16 %v550, %v550
    %v559 = vpack.c.bf16 %v551, %v551
    %v560 = vpack.c.bf16 %v552, %v552
    %v561 = vld [vmem:[#allocation10] sm:$0xf]
    %v562 = vld [vmem:[#allocation10 + $0x4] sm:$0xf]
    %v563 = vld [vmem:[#allocation10 + $0x8] sm:$0xf]
    %v564 = vld [vmem:[#allocation10 + $0xc] sm:$0xf]
    %v565 = vld [vmem:[#allocation10 + $0x10] sm:$0xf]
    %v566 = vld [vmem:[#allocation10 + $0x14] sm:$0xf]
    %v567 = vld [vmem:[#allocation10 + $0x18] sm:$0xf]
    %v568 = vld [vmem:[#allocation10 + $0x1c] sm:$0xf]
    %v569 = vld [vmem:[#allocation10 + $0x20] sm:$0xf]
    %v570 = vld [vmem:[#allocation10 + $0x24] sm:$0xf]
    %v571 = vld [vmem:[#allocation10 + $0x28] sm:$0xf]
    %v572 = vld [vmem:[#allocation10 + $0x2c] sm:$0xf]
    %v573 = vld [vmem:[#allocation10 + $0x30] sm:$0xf]
    %v574 = vld [vmem:[#allocation10 + $0x34] sm:$0xf]
    %v575 = vld [vmem:[#allocation10 + $0x38] sm:$0xf]
    %v576 = vld [vmem:[#allocation10 + $0x3c] sm:$0xf]
    %v577 = vld [vmem:[%s6] sm:$0x1]
    %v579 = vperm.slane %v577, 0
    %v589 = vunpack.c.l.b16 %v553
    %v590 = vunpack.c.l.b16 %v554
    %v591 = vunpack.c.l.b16 %v555
    %v592 = vunpack.c.l.b16 %v556
    %v593 = vunpack.c.l.b16 %v557
    %v594 = vunpack.c.l.b16 %v558
    %v595 = vunpack.c.l.b16 %v559
    %v596 = vunpack.c.l.b16 %v560
    %v597 = vpack.c.b16 %v590, %v589
    %v598 = vpack.c.b16 %v592, %v591
    %v599 = vpack.c.b16 %v594, %v593
    %v600 = vpack.c.b16 %v596, %v595
    %v621 = vunpack.c.l.b16 %v561
    %v622 = vunpack.c.l.b16 %v562
    %v623 = vunpack.c.l.b16 %v563
    %v624 = vunpack.c.l.b16 %v564
    %v625 = vunpack.c.l.b16 %v565
    %v626 = vunpack.c.l.b16 %v566
    %v627 = vunpack.c.l.b16 %v567
    %v628 = vunpack.c.l.b16 %v568
    %v629 = vunpack.c.l.b16 %v569
    %v630 = vunpack.c.l.b16 %v570
    %v631 = vunpack.c.l.b16 %v571
    %v632 = vunpack.c.l.b16 %v572
    %v633 = vunpack.c.l.b16 %v573
    %v634 = vunpack.c.l.b16 %v574
    %v635 = vunpack.c.l.b16 %v575
    %v636 = vunpack.c.l.b16 %v576
    %v637 = vpack.c.b16 %v622, %v621
    %v638 = vpack.c.b16 %v624, %v623
    %v639 = vpack.c.b16 %v626, %v625
    %v640 = vpack.c.b16 %v628, %v627
    %v641 = vpack.c.b16 %v630, %v629
    %v642 = vpack.c.b16 %v632, %v631
    %v643 = vpack.c.b16 %v634, %v633
    %v644 = vpack.c.b16 %v636, %v635
    %653 = vmatpush.bf16.msra.mxu0 %v644
    %654 = vmatpush.bf16.msra.mxu0 %v643
    %655 = vmatpush.bf16.msra.mxu0 %v642
    %656 = vmatpush.bf16.msra.mxu0 %v641
    %657 = vmatpush.bf16.msra.mxu0 %v640
    %658 = vmatpush.bf16.msra.mxu0 %v639
    %659 = vmatpush.bf16.msra.mxu0 %v638
    %660 = vmatpush.bf16.msra.mxu0 %v637
    %661 = vmatmul.bf16.gmra.mxu0 %v597
    %v662 = vpop.f32.mrf.mxu0
    %v663 = vadd.f32 %v579, %v662
    %v664 = vpop.f32.mrf.mxu0
    %v665 = vadd.f32 %v579, %v664
    %666 = vmatmul.bf16.gmra.mxu0 %v598
    %v667 = vpop.f32.mrf.mxu0
    %v668 = vadd.f32 %v579, %v667
    %v669 = vpop.f32.mrf.mxu0
    %v670 = vadd.f32 %v579, %v669
    %671 = vmatmul.bf16.gmra.mxu0 %v599
    %v672 = vpop.f32.mrf.mxu0
    %v673 = vadd.f32 %v579, %v672
    %v674 = vpop.f32.mrf.mxu0
    %v675 = vadd.f32 %v579, %v674
    %676 = vmatmul.bf16.gmra.mxu0 %v600
    %v677 = vpop.f32.mrf.mxu0
    %v678 = vadd.f32 %v579, %v677
    %v679 = vpop.f32.mrf.mxu0
    %v680 = vadd.f32 %v579, %v679
    %681 = vdwg.mxu0
    %682 = vst [vmem:[#allocation2] sm:$0xff] %v663
    %683 = vst [vmem:[#allocation2 + $0x8] sm:$0xff] %v665
    %684 = vst [vmem:[#allocation2 + $0x10] sm:$0xff] %v668
    %685 = vst [vmem:[#allocation2 + $0x18] sm:$0xff] %v670
    %686 = vst [vmem:[#allocation2 + $0x20] sm:$0xff] %v673
    %687 = vst [vmem:[#allocation2 + $0x28] sm:$0xff] %v675
    %688 = vst [vmem:[#allocation2 + $0x30] sm:$0xff] %v678
    %689 = vst [vmem:[#allocation2 + $0x38] sm:$0xff] %v680
    %v690 = vld [vmem:[#allocation12] sm:$0xf]
    %v691 = vld [vmem:[#allocation12 + $0x4] sm:$0xf]
    %v692 = vld [vmem:[#allocation12 + $0x8] sm:$0xf]
    %v693 = vld [vmem:[#allocation12 + $0xc] sm:$0xf]
    %v694 = vld [vmem:[#allocation12 + $0x10] sm:$0xf]
    %v695 = vld [vmem:[#allocation12 + $0x14] sm:$0xf]
    %v696 = vld [vmem:[#allocation12 + $0x18] sm:$0xf]
    %v697 = vld [vmem:[#allocation12 + $0x1c] sm:$0xf]
    %v698 = vld [vmem:[#allocation12 + $0x20] sm:$0xf]
    %v699 = vld [vmem:[#allocation12 + $0x24] sm:$0xf]
    %v700 = vld [vmem:[#allocation12 + $0x28] sm:$0xf]
    %v701 = vld [vmem:[#allocation12 + $0x2c] sm:$0xf]
    %v702 = vld [vmem:[#allocation12 + $0x30] sm:$0xf]
    %v703 = vld [vmem:[#allocation12 + $0x34] sm:$0xf]
    %v704 = vld [vmem:[#allocation12 + $0x38] sm:$0xf]
    %v705 = vld [vmem:[#allocation12 + $0x3c] sm:$0xf]
    %v706 = vld [vmem:[#allocation2] sm:$0xff]
    %v723 = vunpack.c.l.b16 %v690
    %v724 = vunpack.c.l.b16 %v691
    %v725 = vunpack.c.l.b16 %v692
    %v726 = vunpack.c.l.b16 %v693
    %v727 = vunpack.c.l.b16 %v694
    %v728 = vunpack.c.l.b16 %v695
    %v729 = vunpack.c.l.b16 %v696
    %v730 = vunpack.c.l.b16 %v697
    %v731 = vunpack.c.l.b16 %v698
    %v732 = vunpack.c.l.b16 %v699
    %v733 = vunpack.c.l.b16 %v700
    %v734 = vunpack.c.l.b16 %v701
    %v735 = vunpack.c.l.b16 %v702
    %v736 = vunpack.c.l.b16 %v703
    %v737 = vunpack.c.l.b16 %v704
    %v738 = vunpack.c.l.b16 %v705
    %v739 = vpack.c.b16 %v724, %v723
    %v740 = vpack.c.b16 %v726, %v725
    %v741 = vpack.c.b16 %v728, %v727
    %v742 = vpack.c.b16 %v730, %v729
    %v743 = vpack.c.b16 %v732, %v731
    %v744 = vpack.c.b16 %v734, %v733
    %v745 = vpack.c.b16 %v736, %v735
    %v746 = vpack.c.b16 %v738, %v737
    %755 = vmatpush.bf16.msra.mxu0 %v746
    %756 = vmatpush.bf16.msra.mxu0 %v745
    %757 = vmatpush.bf16.msra.mxu0 %v744
    %758 = vmatpush.bf16.msra.mxu0 %v743
    %759 = vmatpush.bf16.msra.mxu0 %v742
    %760 = vmatpush.bf16.msra.mxu0 %v741
    %761 = vmatpush.bf16.msra.mxu0 %v740
    %762 = vmatpush.bf16.msra.mxu0 %v739
    %763 = vmatmul.bf16.gmra.mxu0 0
    %v764 = vpop.f32.mrf.mxu0
    %v765 = vadd.f32 %v706, %v764
    %v766 = vpop.f32.mrf.mxu0
    %767 = vdwg.mxu0
    %v768 = vtanh.pop %v765
    %v769 = vmul.f32 %v768, 0.5
    %v770 = vadd.f32 %v769, 0.0
    %771 = vst [vmem:[#allocation17] sm:$0xff] %v770
    %v772 = vpack.c.bf16 %v770, %v770
    %v773 = vld [vmem:[%s392] sm:$0xff]
    %774 = vmatpush.bf16.msra.mxu0 %v746
    %775 = vmatpush.bf16.msra.mxu0 %v745
    %776 = vmatpush.bf16.msra.mxu0 %v744
    %777 = vmatpush.bf16.msra.mxu0 %v743
    %778 = vmatpush.bf16.msra.mxu0 %v742
    %779 = vmatpush.bf16.msra.mxu0 %v741
    %780 = vmatpush.bf16.msra.mxu0 %v740
    %781 = vmatpush.bf16.msra.mxu0 %v739
    %782 = vmatmul.bf16.gmra.mxu0 %v772
    %v783 = vpop.f32.mrf.mxu0
    %v784 = vadd.f32 %v773, %v783
    %v785 = vpop.f32.mrf.mxu0
    %786 = vdwg.mxu0
    %v787 = vmul.f32 %v770, 0.5
    %v788 = vtanh.pop %v784
    %v789 = vmul.f32 %v788, 0.5
    %v790 = vadd.f32 %v787, %v789
    %s791 = scalar_lea.vmem [#allocation17], 8
    %792 = vst [vmem:[%s791] sm:$0xff] %v790
    %v793 = vpack.c.bf16 %v790, %v790
    %v794 = vld [vmem:[%s414] sm:$0xff]
    %795 = vmatpush.bf16.msra.mxu0 %v746
    %796 = vmatpush.bf16.msra.mxu0 %v745
    %797 = vmatpush.bf16.msra.mxu0 %v744
    %798 = vmatpush.bf16.msra.mxu0 %v743
    %799 = vmatpush.bf16.msra.mxu0 %v742
    %800 = vmatpush.bf16.msra.mxu0 %v741
    %801 = vmatpush.bf16.msra.mxu0 %v740
    %802 = vmatpush.bf16.msra.mxu0 %v739
    %803 = vmatmul.bf16.gmra.mxu0 %v793
    %v804 = vpop.f32.mrf.mxu0
    %v805 = vadd.f32 %v794, %v804
    %v806 = vpop.f32.mrf.mxu0
    %807 = vdwg.mxu0
    %v808 = vmul.f32 %v790, 0.5
    %v809 = vtanh.pop %v805
    %v810 = vmul.f32 %v809, 0.5
    %v811 = vadd.f32 %v808, %v810
    %s812 = scalar_lea.vmem [#allocation17], 16
    %813 = vst [vmem:[%s812] sm:$0xff] %v811
    %v814 = vpack.c.bf16 %v811, %v811
    %v815 = vld [vmem:[%s436] sm:$0xff]
    %816 = vmatpush.bf16.msra.mxu0 %v746
    %817 = vmatpush.bf16.msra.mxu0 %v745
    %818 = vmatpush.bf16.msra.mxu0 %v744
    %819 = vmatpush.bf16.msra.mxu0 %v743
    %820 = vmatpush.bf16.msra.mxu0 %v742
    %821 = vmatpush.bf16.msra.mxu0 %v741
    %822 = vmatpush.bf16.msra.mxu0 %v740
    %823 = vmatpush.bf16.msra.mxu0 %v739
    %824 = vmatmul.bf16.gmra.mxu0 %v814
    %v825 = vpop.f32.mrf.mxu0
    %v826 = vadd.f32 %v815, %v825
    %v827 = vpop.f32.mrf.mxu0
    %828 = vdwg.mxu0
    %v829 = vmul.f32 %v811, 0.5
    %v830 = vtanh.pop %v826
    %v831 = vmul.f32 %v830, 0.5
    %v832 = vadd.f32 %v829, %v831
    %s833 = scalar_lea.vmem [#allocation17], 24
    %834 = vst [vmem:[%s833] sm:$0xff] %v832
    %v835 = vpack.c.bf16 %v832, %v832
    %v836 = vld [vmem:[%s458] sm:$0xff]
    %837 = vmatpush.bf16.msra.mxu0 %v746
    %838 = vmatpush.bf16.msra.mxu0 %v745
    %839 = vmatpush.bf16.msra.mxu0 %v744
    %840 = vmatpush.bf16.msra.mxu0 %v743
    %841 = vmatpush.bf16.msra.mxu0 %v742
    %842 = vmatpush.bf16.msra.mxu0 %v741
    %843 = vmatpush.bf16.msra.mxu0 %v740
    %844 = vmatpush.bf16.msra.mxu0 %v739
    %845 = vmatmul.bf16.gmra.mxu0 %v835
    %v846 = vpop.f32.mrf.mxu0
    %v847 = vadd.f32 %v836, %v846
    %v848 = vpop.f32.mrf.mxu0
    %849 = vdwg.mxu0
    %v850 = vmul.f32 %v832, 0.5
    %v851 = vtanh.pop %v847
    %v852 = vmul.f32 %v851, 0.5
    %v853 = vadd.f32 %v850, %v852
    %s854 = scalar_lea.vmem [#allocation17], 32
    %855 = vst [vmem:[%s854] sm:$0xff] %v853
    %v856 = vpack.c.bf16 %v853, %v853
    %v857 = vld [vmem:[%s480] sm:$0xff]
    %858 = vmatpush.bf16.msra.mxu0 %v746
    %859 = vmatpush.bf16.msra.mxu0 %v745
    %860 = vmatpush.bf16.msra.mxu0 %v744
    %861 = vmatpush.bf16.msra.mxu0 %v743
    %862 = vmatpush.bf16.msra.mxu0 %v742
    %863 = vmatpush.bf16.msra.mxu0 %v741
    %864 = vmatpush.bf16.msra.mxu0 %v740
    %865 = vmatpush.bf16.msra.mxu0 %v739
    %866 = vmatmul.bf16.gmra.mxu0 %v856
    %v867 = vpop.f32.mrf.mxu0
    %v868 = vadd.f32 %v857, %v867
    %v869 = vpop.f32.mrf.mxu0
    %870 = vdwg.mxu0
    %v871 = vmul.f32 %v853, 0.5
    %v872 = vtanh.pop %v868
    %v873 = vmul.f32 %v872, 0.5
    %v874 = vadd.f32 %v871, %v873
    %s875 = scalar_lea.vmem [#allocation17], 40
    %876 = vst [vmem:[%s875] sm:$0xff] %v874
    %v877 = vpack.c.bf16 %v874, %v874
    %v878 = vld [vmem:[%s502] sm:$0xff]
    %879 = vmatpush.bf16.msra.mxu0 %v746
    %880 = vmatpush.bf16.msra.mxu0 %v745
    %881 = vmatpush.bf16.msra.mxu0 %v744
    %882 = vmatpush.bf16.msra.mxu0 %v743
    %883 = vmatpush.bf16.msra.mxu0 %v742
    %884 = vmatpush.bf16.msra.mxu0 %v741
    %885 = vmatpush.bf16.msra.mxu0 %v740
    %886 = vmatpush.bf16.msra.mxu0 %v739
    %887 = vmatmul.bf16.gmra.mxu0 %v877
    %v888 = vpop.f32.mrf.mxu0
    %v889 = vadd.f32 %v878, %v888
    %v890 = vpop.f32.mrf.mxu0
    %891 = vdwg.mxu0
    %v892 = vmul.f32 %v874, 0.5
    %v893 = vtanh.pop %v889
    %v894 = vmul.f32 %v893, 0.5
    %v895 = vadd.f32 %v892, %v894
    %s896 = scalar_lea.vmem [#allocation17], 48
    %897 = vst [vmem:[%s896] sm:$0xff] %v895
    %v898 = vpack.c.bf16 %v895, %v895
    %v899 = vld [vmem:[%s524] sm:$0xff]
    %900 = vmatpush.bf16.msra.mxu0 %v746
    %901 = vmatpush.bf16.msra.mxu0 %v745
    %902 = vmatpush.bf16.msra.mxu0 %v744
    %903 = vmatpush.bf16.msra.mxu0 %v743
    %904 = vmatpush.bf16.msra.mxu0 %v742
    %905 = vmatpush.bf16.msra.mxu0 %v741
    %906 = vmatpush.bf16.msra.mxu0 %v740
    %907 = vmatpush.bf16.msra.mxu0 %v739
    %908 = vmatmul.bf16.gmra.mxu0 %v898
    %v909 = vpop.f32.mrf.mxu0
    %v910 = vadd.f32 %v899, %v909
    %v911 = vpop.f32.mrf.mxu0
    %912 = vdwg.mxu0
    %v913 = vmul.f32 %v895, 0.5
    %v914 = vtanh.pop %v910
    %v915 = vmul.f32 %v914, 0.5
    %v916 = vadd.f32 %v913, %v915
    %s917 = scalar_lea.vmem [#allocation17], 56
    %918 = vst [vmem:[%s917] sm:$0xff] %v916
    %919 = vst [vmem:[#allocation20] sm:$0xff] %v916
    %v920 = vpack.c.bf16 %v916, %v916
    %v921 = vld [vmem:[#allocation13] sm:$0xf]
    %v922 = vld [vmem:[#allocation13 + $0x4] sm:$0xf]
    %v923 = vld [vmem:[#allocation13 + $0x8] sm:$0xf]
    %v924 = vld [vmem:[#allocation13 + $0xc] sm:$0xf]
    %v925 = vld [vmem:[#allocation13 + $0x10] sm:$0xf]
    %v926 = vld [vmem:[#allocation13 + $0x14] sm:$0xf]
    %v927 = vld [vmem:[#allocation13 + $0x18] sm:$0xf]
    %v928 = vld [vmem:[#allocation13 + $0x1c] sm:$0xf]
    %v929 = vld [vmem:[#allocation13 + $0x20] sm:$0xf]
    %v930 = vld [vmem:[#allocation13 + $0x24] sm:$0xf]
    %v931 = vld [vmem:[#allocation13 + $0x28] sm:$0xf]
    %v932 = vld [vmem:[#allocation13 + $0x2c] sm:$0xf]
    %v933 = vld [vmem:[#allocation13 + $0x30] sm:$0xf]
    %v934 = vld [vmem:[#allocation13 + $0x34] sm:$0xf]
    %v935 = vld [vmem:[#allocation13 + $0x38] sm:$0xf]
    %v936 = vld [vmem:[#allocation13 + $0x3c] sm:$0xf]
    %v937 = vld [vmem:[%s8] sm:$0x1]
    %v939 = vperm.slane %v937, 0
    %v957 = vunpack.c.l.b16 %v921
    %v958 = vunpack.c.l.b16 %v922
    %v959 = vunpack.c.l.b16 %v923
    %v960 = vunpack.c.l.b16 %v924
    %v961 = vunpack.c.l.b16 %v925
    %v962 = vunpack.c.l.b16 %v926
    %v963 = vunpack.c.l.b16 %v927
    %v964 = vunpack.c.l.b16 %v928
    %v965 = vunpack.c.l.b16 %v929
    %v966 = vunpack.c.l.b16 %v930
    %v967 = vunpack.c.l.b16 %v931
    %v968 = vunpack.c.l.b16 %v932
    %v969 = vunpack.c.l.b16 %v933
    %v970 = vunpack.c.l.b16 %v934
    %v971 = vunpack.c.l.b16 %v935
    %v972 = vunpack.c.l.b16 %v936
    %v973 = vpack.c.b16 %v958, %v957
    %v974 = vpack.c.b16 %v960, %v959
    %v975 = vpack.c.b16 %v962, %v961
    %v976 = vpack.c.b16 %v964, %v963
    %v977 = vpack.c.b16 %v966, %v965
    %v978 = vpack.c.b16 %v968, %v967
    %v979 = vpack.c.b16 %v970, %v969
    %v980 = vpack.c.b16 %v972, %v971
    %989 = vmatpush.bf16.msra.mxu0 %v980
    %990 = vmatpush.bf16.msra.mxu0 %v979
    %991 = vmatpush.bf16.msra.mxu0 %v978
    %992 = vmatpush.bf16.msra.mxu0 %v977
    %993 = vmatpush.bf16.msra.mxu0 %v976
    %994 = vmatpush.bf16.msra.mxu0 %v975
    %995 = vmatpush.bf16.msra.mxu0 %v974
    %996 = vmatpush.bf16.msra.mxu0 %v973
    %997 = vmatmul.bf16.gmra.mxu0 %v920
    %v998 = vpop.f32.mrf.mxu0
    %v999 = vadd.f32 %v939, %v998
    %v1000 = vpop.f32.mrf.mxu0
    %1001 = vdwg.mxu0
    %1002 = vst [vmem:[#allocation19] sm:$0xff] %v999
    %v1003 = vld [vmem:[#allocation15] sm:$0xf]
    %v1004 = vld [vmem:[#allocation15 + $0x4] sm:$0xf]
    %v1005 = vld [vmem:[#allocation15 + $0x8] sm:$0xf]
    %v1006 = vld [vmem:[#allocation15 + $0xc] sm:$0xf]
    %v1007 = vld [vmem:[#allocation15 + $0x10] sm:$0xf]
    %v1008 = vld [vmem:[#allocation15 + $0x14] sm:$0xf]
    %v1009 = vld [vmem:[#allocation15 + $0x18] sm:$0xf]
    %v1010 = vld [vmem:[#allocation15 + $0x1c] sm:$0xf]
    %v1011 = vld [vmem:[#allocation15 + $0x20] sm:$0xf]
    %v1012 = vld [vmem:[#allocation15 + $0x24] sm:$0xf]
    %v1013 = vld [vmem:[#allocation15 + $0x28] sm:$0xf]
    %v1014 = vld [vmem:[#allocation15 + $0x2c] sm:$0xf]
    %v1015 = vld [vmem:[#allocation15 + $0x30] sm:$0xf]
    %v1016 = vld [vmem:[#allocation15 + $0x34] sm:$0xf]
    %v1017 = vld [vmem:[#allocation15 + $0x38] sm:$0xf]
    %v1018 = vld [vmem:[#allocation15 + $0x3c] sm:$0xf]
    %v1019 = vld [vmem:[%s10] sm:$0x1]
    %v1021 = vperm.slane %v1019, 0
    %v1039 = vunpack.c.l.b16 %v1003
    %v1040 = vunpack.c.l.b16 %v1004
    %v1041 = vunpack.c.l.b16 %v1005
    %v1042 = vunpack.c.l.b16 %v1006
    %v1043 = vunpack.c.l.b16 %v1007
    %v1044 = vunpack.c.l.b16 %v1008
    %v1045 = vunpack.c.l.b16 %v1009
    %v1046 = vunpack.c.l.b16 %v1010
    %v1047 = vunpack.c.l.b16 %v1011
    %v1048 = vunpack.c.l.b16 %v1012
    %v1049 = vunpack.c.l.b16 %v1013
    %v1050 = vunpack.c.l.b16 %v1014
    %v1051 = vunpack.c.l.b16 %v1015
    %v1052 = vunpack.c.l.b16 %v1016
    %v1053 = vunpack.c.l.b16 %v1017
    %v1054 = vunpack.c.l.b16 %v1018
    %v1055 = vpack.c.b16 %v1040, %v1039
    %v1056 = vpack.c.b16 %v1042, %v1041
    %v1057 = vpack.c.b16 %v1044, %v1043
    %v1058 = vpack.c.b16 %v1046, %v1045
    %v1059 = vpack.c.b16 %v1048, %v1047
    %v1060 = vpack.c.b16 %v1050, %v1049
    %v1061 = vpack.c.b16 %v1052, %v1051
    %v1062 = vpack.c.b16 %v1054, %v1053
    %1071 = vmatpush.bf16.msra.mxu0 %v1062
    %1072 = vmatpush.bf16.msra.mxu0 %v1061
    %1073 = vmatpush.bf16.msra.mxu0 %v1060
    %1074 = vmatpush.bf16.msra.mxu0 %v1059
    %1075 = vmatpush.bf16.msra.mxu0 %v1058
    %1076 = vmatpush.bf16.msra.mxu0 %v1057
    %1077 = vmatpush.bf16.msra.mxu0 %v1056
    %1078 = vmatpush.bf16.msra.mxu0 %v1055
    %1079 = vmatmul.bf16.gmra.mxu0 %v920
    %v1080 = vpop.f32.mrf.mxu0
    %v1081 = vadd.f32 %v1021, %v1080
    %v1082 = vpop.f32.mrf.mxu0
    %1083 = vdwg.mxu0
    %v1084 = vmax.f32 %v1081, 0.0
    %v1085 = vld [vmem:[%s11] sm:$0x1]
    %v1087 = vperm.slane %v1085, 0
    %v1089 = vmul.f32 %v1084, %v1087
    %1090 = vadd.xlane.f32.xlu0 %v1089
    %v1091 = vpop.xlane.xlu0 %1090
    %v1092 = vld [vmem:[#allocation3] sm:$0x1]
    %v1094 = vperm.slane %v1092, 0
    %v1096 = vadd.f32 %v1091, %v1094
    %v1097 = vxor.u32 %v1096, 2147483648
    %v1098 = vmul.f32 %v1097, 1.442695
    %v1099 = vpow.pop %v1098
    %v1100 = vadd.f32 %v1099, 1.0
    %v1101 = vrcp.pop %v1100
    %v1102 = vmul.f32 %v1100, %v1101
    %v1103 = vsub.f32 1.0, %v1102
    %v1104 = vmul.f32 %v1101, %v1103
    %v1105 = vadd.f32 %v1101, %v1104
    %vm1106 = vweird.f32 %v1100
    %vm1107 = vweird.f32 %v1101
    %vm1108 = vmor %vm1106, %vm1107
    %v1109 = vsel %vm1108, %v1101, %v1105
    %v1110 = vand.u32 2147483647, %v1100
    %vm1111 = vcmp.eq.f32.partialorder %v1110, 8.507059e+37
    %v1112 = vand.u32 %v1100, 2147483648
    %v1113 = vor.u32 1.1754944e-38, %v1112
    %v1114 = vsel %vm1111, %v1113, %v1109
    %v1115 = vmul.f32 1.0, %v1114
    %v1116 = vlaneseq
    %v1117 = vand.u32 %v1116, 127
    %vm1118 = vcmp.lt.s32.totalorder %v1117, 8
    %v1119 = vsel %vm1118, %v999, -1e+30
    %1120 = vmax.xlane.f32.xlu0 %v1119
    %v1121 = vpop.xlane.xlu0 %1120
    %v1122 = vsub.f32 %v1119, %v1121
    %v1123 = vmul.f32 %v1122, 1.442695
    %v1124 = vpow.pop %v1123
    %1125 = vadd.xlane.f32.xlu0 %v1124
    %v1126 = vpop.xlane.xlu0 %1125
    %v1127 = vrcp.pop %v1126
    %vm1128 = vcmp.eq.s32.totalorder %v1117, 0
    %vm1129 = vcmp.eq.s32.totalorder %v1117, 1
    %1131 = vset.pattern.permute.xlu0 0
    %1132 = vperm.xlu0 %1131, %v1115
    %v1133 = vpop.permute.xlu0 %1132
    %v1135 = vsel %vm1129, %v1133, 0.0
    %v1136 = vsel %vm1128, %v1127, %v1135
    %1137 = vst [vmem:[#allocation22] sm:$0xff] %v1136
    // Predicated region
    $region82: #{tpu_custom_call.1} parent=1 // pred_check
      _
    $region83: #{tpu_custom_call.1} parent=1 // pred_check_branch
      %1139 = sbr.rel (0) target = $region85
    $region84: #{tpu_custom_call.1} parent=1 // pred_region
      %1141 = vsyncadd [#allocation6], 0
      %s1142 = sshll.u32 [#allocation16], 4
      %s1143 = int_to_ptr.vmem [resolvable:$true] %s1142
      %s1144 = sshll.u32 %s13, 4
      %s1145 = int_to_ptr.hbm [resolvable:$true] %s1144
      %1150 = dma.vmem_to_hbm [thread:$0]  %s1143, 1024, %s1145, [#allocation6], 128, 128, 8
    $region85: #{tpu_custom_call.1} parent=1 // pred_fallthru
      _
    // Predicated region
    $region86: #{tpu_custom_call.1} parent=1 // pred_check
      _
    $region87: #{tpu_custom_call.1} parent=1 // pred_check_branch
      %1152 = sbr.rel (0) target = $region89
    $region88: #{tpu_custom_call.1} parent=1 // pred_region
      %1154 = vsyncadd [#allocation18], 0
      %s1155 = sshll.u32 [#allocation17], 4
      %s1156 = int_to_ptr.vmem [resolvable:$true] %s1155
      %s1157 = sshll.u32 %s14, 4
      %s1158 = int_to_ptr.hbm [resolvable:$true] %s1157
      %1163 = dma.vmem_to_hbm [thread:$0]  %s1156, 1024, %s1158, [#allocation18], 128, 128, 8
    $region89: #{tpu_custom_call.1} parent=1 // pred_fallthru
      _
    // Predicated region
    $region90: #{tpu_custom_call.1} parent=1 // pred_check
      _
    $region91: #{tpu_custom_call.1} parent=1 // pred_check_branch
      %1165 = sbr.rel (0) target = $region93
    $region92: #{tpu_custom_call.1} parent=1 // pred_region
      %1167 = vsyncadd [#allocation18], 0
      %s1169 = sshll.u32 [#allocation19], 4
      %s1170 = int_to_ptr.vmem [resolvable:$true] %s1169
      %s1171 = sshll.u32 %s15, 4
      %s1172 = int_to_ptr.hbm [resolvable:$true] %s1171
      %1174 = dma.vmem_to_hbm [thread:$0]  %s1170, 128, %s1172, [#allocation18]
    $region93: #{tpu_custom_call.1} parent=1 // pred_fallthru
      _
    // Predicated region
    $region94: #{tpu_custom_call.1} parent=1 // pred_check
      _
    $region95: #{tpu_custom_call.1} parent=1 // pred_check_branch
      %1176 = sbr.rel (0) target = $region97
    $region96: #{tpu_custom_call.1} parent=1 // pred_region
      %1178 = vsyncadd [#allocation21], 0
      %s1180 = sshll.u32 [#allocation20], 4
      %s1181 = int_to_ptr.vmem [resolvable:$true] %s1180
      %s1182 = sshll.u32 %s16, 4
      %s1183 = int_to_ptr.hbm [resolvable:$true] %s1182
      %1185 = dma.vmem_to_hbm [thread:$0]  %s1181, 128, %s1183, [#allocation21]
    $region97: #{tpu_custom_call.1} parent=1 // pred_fallthru
      _
    // Predicated region
    $region98: #{tpu_custom_call.1} parent=1 // pred_check
      _
    $region99: #{tpu_custom_call.1} parent=1 // pred_check_branch
      %1187 = sbr.rel (0) target = $region101
    $region100: #{tpu_custom_call.1} parent=1 // pred_region
      %1189 = vsyncadd [#allocation21], 0
      %s1191 = sshll.u32 [#allocation22], 4
      %s1192 = int_to_ptr.vmem [resolvable:$true] %s1191
      %s1193 = sshll.u32 %s17, 4
      %s1194 = int_to_ptr.hbm [resolvable:$true] %s1193
      %1196 = dma.vmem_to_hbm [thread:$0]  %s1192, 128, %s1194, [#allocation21]
    $region101: #{tpu_custom_call.1} parent=1 // pred_fallthru
      _
    // Predicated region
    $region102: #{tpu_custom_call.1} parent=1 // pred_check
      _
    $region103: #{tpu_custom_call.1} parent=1 // pred_check_branch
      %1198 = sbr.rel (0) target = $region105
    $region104: #{tpu_custom_call.1} parent=1 // pred_region
      %1200 = dma.done [#allocation6], 1024
    $region105: #{tpu_custom_call.1} parent=1 // pred_fallthru
      _
    // Predicated region
    $region106: #{tpu_custom_call.1} parent=1 // pred_check
      _
    $region107: #{tpu_custom_call.1} parent=1 // pred_check_branch
      %1202 = sbr.rel (0) target = $region109
    $region108: #{tpu_custom_call.1} parent=1 // pred_region
      %1204 = dma.done [#allocation18], 1024
    $region109: #{tpu_custom_call.1} parent=1 // pred_fallthru
      _
    // Predicated region
    $region110: #{tpu_custom_call.1} parent=1 // pred_check
      _
    $region111: #{tpu_custom_call.1} parent=1 // pred_check_branch
      %1206 = sbr.rel (0) target = $region113
    $region112: #{tpu_custom_call.1} parent=1 // pred_region
      %1208 = dma.done [#allocation18], 128
    $region113: #{tpu_custom_call.1} parent=1 // pred_fallthru
      _
    // Predicated region
    $region114: #{tpu_custom_call.1} parent=1 // pred_check
      _
    $region115: #{tpu_custom_call.1} parent=1 // pred_check_branch
      %1210 = sbr.rel (0) target = $region117
    $region116: #{tpu_custom_call.1} parent=1 // pred_region
      %1212 = dma.done [#allocation21], 128
    $region117: #{tpu_custom_call.1} parent=1 // pred_fallthru
      _
    // Predicated region
    $region118: #{tpu_custom_call.1} parent=1 // pred_check
      _
    $region119: #{tpu_custom_call.1} parent=1 // pred_check_branch
      %1214 = sbr.rel (0) target = $region121
    $region120: #{tpu_custom_call.1} parent=1 // pred_region
      %1216 = dma.done [#allocation21], 128
    $region121: #{tpu_custom_call.1} parent=1 // pred_fallthru
      _
    %1217 = vsyncpa [#allocation5], 1
    %1218 = vsyncpa [#allocation8], 1
    %1219 = vsyncpa [#allocation11], 1
    %1220 = vsyncpa [#allocation14], 1
    %1221 = vsyncpa [#allocation6], 1
    %1222 = vsyncpa [#allocation18], 1
    %1223 = vsyncpa [#allocation21], 1

</llo_original>
